<compile_context>
chip_gen: v7x
topology: tpu7x:2x2x1
jax: 0.10.0
libtpu: 0.0.40
codegen_flags: <defaults>
</compile_context>

<pallas_src>
import functools

import jax
import jax.numpy as jnp
from jax import lax
from jax.experimental import pallas as pl
from jax.experimental.pallas import tpu as pltpu


ROW_TILE = 4096                       # rows streamed per grid step (clamped)
VMEM_LIMIT_BYTES = 32 * 1024 * 1024   # safe on v5e/v6e (128 MiB) and v7x (64 MiB)

# dot_general dimension numbers
_TN = (((0,), (0,)), ((), ()))        # contract rows of both operands: q^T @ k
_NT = (((1,), (1,)), ((), ()))        # contract cols of both operands: v @ p^T


def _round_up(x, m):
    return ((x + m - 1) // m) * m


def _mlp3(x, w0, b0, w1, b1, w2, b2):
    """Linear -> ReLU -> Linear -> ReLU -> Linear on a row tile (f32 accumulate)."""
    h = jnp.maximum(jnp.dot(x, w0, preferred_element_type=jnp.float32) + b0, 0.0)
    h = jnp.maximum(jnp.dot(h, w1, preferred_element_type=jnp.float32) + b1, 0.0)
    return jnp.dot(h, w2, preferred_element_type=jnp.float32) + b2


# ---------------------------------------------------------------------------
# Pass 1: fused q/k branches + q^T k score reduction over the N grid axis
# ---------------------------------------------------------------------------

def _make_scores_kernel(n_rows, tile):
    need_mask = (n_rows % tile) != 0  # static; mask padded rows of last tile

    def kernel(x_ref,
               wq0, bq0, wq1, bq1, wq2, bq2,
               wk0, bk0, wk1, bk1, wk2, bk2,
               s_ref):
        @pl.when(pl.program_id(0) == 0)
        def _init():
            s_ref[...] = jnp.zeros_like(s_ref)

        x = x_ref[...]
        q = _mlp3(x, wq0[...], bq0[...], wq1[...], bq1[...], wq2[...], bq2[...])
        k = _mlp3(x, wk0[...], bk0[...], wk1[...], bk1[...], wk2[...], bk2[...])
        if need_mask:
            rows = pl.program_id(0) * tile + lax.broadcasted_iota(
                jnp.int32, (tile, 1), 0)
            valid = rows < n_rows
            q = jnp.where(valid, q, 0.0)
            k = jnp.where(valid, k, 0.0)
        # scores += q^T @ k  (accumulated in the resident (h1, h1) output block)
        s_ref[...] += lax.dot_general(q, k, _TN,
                                      preferred_element_type=jnp.float32)

    return kernel


# ---------------------------------------------------------------------------
# Pass 2: softmax(scores) + v branch (recomputed) + v @ p^T + layers2
# ---------------------------------------------------------------------------

def _output_kernel(s_ref, x_ref,
                   wv0, bv0, wv1, bv1, wv2, bv2,
                   w20, b20, w21, b21,
                   o_ref):
    # softmax over the last dim of the tiny resident (h1, h1) score matrix.
    s = s_ref[...]
    m = jnp.max(s, axis=-1, keepdims=True)
    e = jnp.exp(s - m)
    p = e / jnp.sum(e, axis=-1, keepdims=True)

    x = x_ref[...]
    v = _mlp3(x, wv0[...], bv0[...], wv1[...], bv1[...], wv2[...], bv2[...])
    # p_val = (p @ v^T)^T == v @ p^T
    head = lax.dot_general(v, p, _NT, preferred_element_type=jnp.float32)
    # layers2 (head concat already folded into w20): Linear -> ReLU -> Linear.
    h = jnp.maximum(
        jnp.dot(head, w20[...], preferred_element_type=jnp.float32) + b20[...],
        0.0)
    # Output is (tile, out_dim); out_dim is narrow but writing it directly
    # minimizes HBM bytes (store slot is not the binding resource here).
    o_ref[...] = jnp.dot(h, w21[...], preferred_element_type=jnp.float32) + b21[...]


# ---------------------------------------------------------------------------
# Wrappers
# ---------------------------------------------------------------------------

def _const_spec(arr):
    """Full-array block with a constant index_map: DMA once, stays resident."""
    nd = arr.ndim
    return pl.BlockSpec(arr.shape, lambda i: (0,) * nd)


@functools.partial(jax.jit, static_argnames=("numb_MultiHead",))
def mlp_forward(x, params, *, numb_MultiHead):
    lead_shape = x.shape[:-1]
    in_dim = x.shape[-1]
    xf = x.reshape(-1, in_dim)
    n_rows = xf.shape[0]

    assert len(params["q"]) == 3 and len(params["layers2"]) == 2, \
        "kernels specialized to hidden_list of length 3"

    q_flat = [t for wb in params["q"] for t in wb]
    k_flat = [t for wb in params["k"] for t in wb]
    v_flat = [t for wb in params["v"] for t in wb]
    h1 = params["q"][2][0].shape[1]

    # Fold the identical-head concat into the first layers2 weight:
    #   concat([head]*M, 1) @ W20 == head @ sum_m W20[m*h1:(m+1)*h1, :]
    (w20_full, b20), (w21, b21) = params["layers2"]
    h2 = w20_full.shape[1]
    out_dim = w21.shape[1]
    w20 = w20_full.reshape(numb_MultiHead, h1, h2).sum(axis=0)

    tile = min(ROW_TILE, _round_up(n_rows, 8))
    num_tiles = -(-n_rows // tile)

    x_spec = pl.BlockSpec((tile, in_dim), lambda i: (i, 0))

    # ---- pass 1: scores = q^T @ k (reduction over N) ----------------------
    qk_weights = q_flat + k_flat
    flops1 = n_rows * (2 * sum(int(w.shape[0]) * int(w.shape[1])
                               for w in qk_weights[0::2]) + 2 * h1 * h1)
    bytes1 = (n_rows * in_dim * 4 + h1 * h1 * 4
              + sum(int(t.size) * 4 for t in qk_weights))

    scores = pl.pallas_call(
        _make_scores_kernel(n_rows, tile),
        out_shape=jax.ShapeDtypeStruct((h1, h1), jnp.float32),
        grid=(num_tiles,),
        in_specs=[x_spec] + [_const_spec(t) for t in qk_weights],
        out_specs=pl.BlockSpec((h1, h1), lambda i: (0, 0)),
        compiler_params=pltpu.CompilerParams(
            dimension_semantics=("arbitrary",),      # N axis is a reduction
            vmem_limit_bytes=VMEM_LIMIT_BYTES),
        cost_estimate=pl.CostEstimate(
            flops=flops1, transcendentals=0, bytes_accessed=bytes1),
    )(xf, *q_flat, *k_flat)

    # ---- pass 2: softmax + v @ p^T + layers2 -------------------------------
    tail = [w20, b20, w21, b21]
    flops2 = n_rows * (2 * sum(int(w.shape[0]) * int(w.shape[1])
                               for w in v_flat[0::2])
                       + 2 * h1 * h1 + 2 * h1 * h2 + 2 * h2 * out_dim)
    bytes2 = (n_rows * (in_dim + out_dim) * 4 + h1 * h1 * 4
              + sum(int(t.size) * 4 for t in v_flat + tail))

    out = pl.pallas_call(
        _output_kernel,
        out_shape=jax.ShapeDtypeStruct((n_rows, out_dim), jnp.float32),
        grid=(num_tiles,),
        in_specs=([_const_spec(scores), x_spec]
                  + [_const_spec(t) for t in v_flat]
                  + [_const_spec(t) for t in tail]),
        out_specs=pl.BlockSpec((tile, out_dim), lambda i: (i, 0)),
        compiler_params=pltpu.CompilerParams(
            dimension_semantics=("parallel",),       # independent row tiles
            vmem_limit_bytes=VMEM_LIMIT_BYTES),
        cost_estimate=pl.CostEstimate(
            flops=flops2, transcendentals=num_tiles * h1 * h1,
            bytes_accessed=bytes2),
    )(scores, xf, *v_flat, w20, b20, w21, b21)

    return out.reshape(*lead_shape, out_dim)


# ---------------------------------------------------------------------------
# Parameter setup (deterministic, PyTorch-Linear-like uniform init)
# ---------------------------------------------------------------------------

def _linear_params(key, fan_in, fan_out):
    kw, kb = jax.random.split(key)
    bound = 1.0 / (fan_in ** 0.5)
    # Stored as (in, out) so kernels compute x @ W + b directly.
    w = jax.random.uniform(kw, (fan_in, fan_out), jnp.float32, -bound, bound)
    b = jax.random.uniform(kb, (1, fan_out), jnp.float32, -bound, bound)
    return w, b


def init_mlp_params(key, in_dim, out_dim, hidden_list, numb_MultiHead):
    keys = iter(jax.random.split(key, 16))

    def branch(lastv):
        p = []
        for hidden in hidden_list[:2]:
            p.append(_linear_params(next(keys), lastv, hidden))
            lastv = hidden
        p.append(_linear_params(next(keys), lastv, lastv))
        return p, lastv

    params = {}
    params["q"], h1 = branch(in_dim)
    params["k"], _ = branch(in_dim)
    params["v"], _ = branch(in_dim)

    lastv = h1 * numb_MultiHead
    l2 = []
    for hidden in hidden_list[2:]:
        l2.append(_linear_params(next(keys), lastv, hidden))
        lastv = hidden
    l2.append(_linear_params(next(keys), lastv, out_dim))
    params["layers2"] = l2
    return params


# ---------------------------------------------------------------------------
# Pure-JAX reference (matches the torch module: concat of identical heads)
# ---------------------------------------------------------------------------

def _ref_forward(x, params, numb_MultiHead):
    def lin(h, wb):
        return h @ wb[0] + wb[1]

    def branch(h, p):
        h = jax.nn.relu(lin(h, p[0]))
        h = jax.nn.relu(lin(h, p[1]))
        return lin(h, p[2])

    shape = x.shape[:-1]
    xf = x.reshape(-1, x.shape[-1])
    q, k, v = branch(xf, params["q"]), branch(xf, params["k"]), branch(xf, params["v"])
    scores = q.T @ k
    p_attn = jax.nn.softmax(scores, axis=-1)
    head = (p_attn @ v.T).T
    out = jnp.concatenate([head] * numb_MultiHead, axis=1)
    out = jax.nn.relu(lin(out, params["layers2"][0]))
    out = lin(out, params["layers2"][1])
    return out.reshape(*shape, -1)


if __name__ == "__main__":
    # Small, module-consistent config.
    in_dim, out_dim = 4, 4
    hidden_list = [32, 32, 32]      # args.hidden_list
    numb_MultiHead = 2              # args.numb_MultiHead
    batch, seq = 2, 8               # x: (2, 8, 4) -> flattened N = 16

    root = jax.random.PRNGKey(0)
    kx, kp = jax.random.split(root)
    x = jax.random.normal(kx, (batch, seq, in_dim), dtype=jnp.float32)
    params = init_mlp_params(kp, in_dim, out_dim, hidden_list, numb_MultiHead)

    out = mlp_forward(x, params, numb_MultiHead=numb_MultiHead)
    out = jax.block_until_ready(out)

    ref = _ref_forward(x, params, numb_MultiHead)
    assert out.shape == (batch, seq, out_dim), out.shape
    assert jnp.allclose(out, ref, rtol=1e-4, atol=1e-5), \
        float(jnp.max(jnp.abs(out - ref)))

    print("KERNEL_OK")
</pallas_src>

<mosaic_0001>
module attributes {stable_mosaic.version = 11 : i64} {
  func.func @kernel(%arg0: i32, %arg1: memref<16x4xf32, #tpu.memory_space<vmem>>, %arg2: memref<4x32xf32, #tpu.memory_space<vmem>>, %arg3: memref<1x32xf32, #tpu.memory_space<vmem>>, %arg4: memref<32x32xf32, #tpu.memory_space<vmem>>, %arg5: memref<1x32xf32, #tpu.memory_space<vmem>>, %arg6: memref<32x32xf32, #tpu.memory_space<vmem>>, %arg7: memref<1x32xf32, #tpu.memory_space<vmem>>, %arg8: memref<4x32xf32, #tpu.memory_space<vmem>>, %arg9: memref<1x32xf32, #tpu.memory_space<vmem>>, %arg10: memref<32x32xf32, #tpu.memory_space<vmem>>, %arg11: memref<1x32xf32, #tpu.memory_space<vmem>>, %arg12: memref<32x32xf32, #tpu.memory_space<vmem>>, %arg13: memref<1x32xf32, #tpu.memory_space<vmem>>, %arg14: memref<32x32xf32, #tpu.memory_space<vmem>>) attributes {dimension_semantics = [#tpu.dimension_semantics<arbitrary>], iteration_bounds = array<i64: 1>, scalar_prefetch = 0 : i64, scratch_operands = 0 : i64, tpu.core_type = #tpu.core_type<tc>, window_params = [{transform_indices = @transform_0, window_bounds = array<i64: 16, 4>}, {pipeline_mode = #tpu.pipeline_mode<synchronous>, transform_indices = @transform_1, window_bounds = array<i64: 4, 32>}, {pipeline_mode = #tpu.pipeline_mode<synchronous>, transform_indices = @transform_2, window_bounds = array<i64: 1, 32>}, {pipeline_mode = #tpu.pipeline_mode<synchronous>, transform_indices = @transform_3, window_bounds = array<i64: 32, 32>}, {pipeline_mode = #tpu.pipeline_mode<synchronous>, transform_indices = @transform_4, window_bounds = array<i64: 1, 32>}, {pipeline_mode = #tpu.pipeline_mode<synchronous>, transform_indices = @transform_5, window_bounds = array<i64: 32, 32>}, {pipeline_mode = #tpu.pipeline_mode<synchronous>, transform_indices = @transform_6, window_bounds = array<i64: 1, 32>}, {pipeline_mode = #tpu.pipeline_mode<synchronous>, transform_indices = @transform_7, window_bounds = array<i64: 4, 32>}, {pipeline_mode = #tpu.pipeline_mode<synchronous>, transform_indices = @transform_8, window_bounds = array<i64: 1, 32>}, {pipeline_mode = #tpu.pipeline_mode<synchronous>, transform_indices = @transform_9, window_bounds = array<i64: 32, 32>}, {pipeline_mode = #tpu.pipeline_mode<synchronous>, transform_indices = @transform_10, window_bounds = array<i64: 1, 32>}, {pipeline_mode = #tpu.pipeline_mode<synchronous>, transform_indices = @transform_11, window_bounds = array<i64: 32, 32>}, {pipeline_mode = #tpu.pipeline_mode<synchronous>, transform_indices = @transform_12, window_bounds = array<i64: 1, 32>}, {pipeline_mode = #tpu.pipeline_mode<synchronous>, transform_indices = @transform_13, window_bounds = array<i64: 32, 32>}]} {
    %c0_i32 = arith.constant 0 : i32
    %0 = arith.cmpi eq, %arg0, %c0_i32 : i32
    %1 = arith.extui %0 : i1 to i32
    %c0_i32_0 = arith.constant 0 : i32
    %2 = arith.cmpi ne, %1, %c0_i32_0 : i32
    scf.if %2 {
      %cst_40 = arith.constant 0.000000e+00 : f32
      %46 = vector.broadcast %cst_40 : f32 to vector<32x32xf32>
      %c0_41 = arith.constant 0 : index
      %c0_42 = arith.constant 0 : index
      %47 = vector.load %arg14[%c0_41, %c0_42] : memref<32x32xf32, #tpu.memory_space<vmem>>, vector<32x32xf32>
      tpu.vector_store %arg14[%c0_41, %c0_42], %46 {strides = array<i32>} : memref<32x32xf32, #tpu.memory_space<vmem>>, vector<32x32xf32>,
    } else {
    }
    %c0 = arith.constant 0 : index
    %c0_1 = arith.constant 0 : index
    %3 = vector.load %arg1[%c0, %c0_1] : memref<16x4xf32, #tpu.memory_space<vmem>>, vector<16x4xf32>
    %c0_2 = arith.constant 0 : index
    %c0_3 = arith.constant 0 : index
    %4 = vector.load %arg2[%c0_2, %c0_3] : memref<4x32xf32, #tpu.memory_space<vmem>>, vector<4x32xf32>
    %c0_4 = arith.constant 0 : index
    %c0_5 = arith.constant 0 : index
    %5 = vector.load %arg3[%c0_4, %c0_5] : memref<1x32xf32, #tpu.memory_space<vmem>>, vector<1x32xf32>
    %c0_6 = arith.constant 0 : index
    %c0_7 = arith.constant 0 : index
    %6 = vector.load %arg4[%c0_6, %c0_7] : memref<32x32xf32, #tpu.memory_space<vmem>>, vector<32x32xf32>
    %c0_8 = arith.constant 0 : index
    %c0_9 = arith.constant 0 : index
    %7 = vector.load %arg5[%c0_8, %c0_9] : memref<1x32xf32, #tpu.memory_space<vmem>>, vector<1x32xf32>
    %c0_10 = arith.constant 0 : index
    %c0_11 = arith.constant 0 : index
    %8 = vector.load %arg6[%c0_10, %c0_11] : memref<32x32xf32, #tpu.memory_space<vmem>>, vector<32x32xf32>
    %c0_12 = arith.constant 0 : index
    %c0_13 = arith.constant 0 : index
    %9 = vector.load %arg7[%c0_12, %c0_13] : memref<1x32xf32, #tpu.memory_space<vmem>>, vector<1x32xf32>
    %cst = arith.constant dense<0.000000e+00> : vector<16x32xf32>
    %10 = tpu.matmul %3, %4, %cst {dimension_numbers = #tpu.dot_dimension_numbers<[1], [0], [0], [1], [0, 0, 1, 1], [], []>} : vector<16x4xf32>, vector<4x32xf32>, vector<16x32xf32> -> vector<16x32xf32>
    %11 = vector.broadcast %5 : vector<1x32xf32> to vector<16x32xf32>
    %12 = arith.addf %10, %11 : vector<16x32xf32>
    %cst_14 = arith.constant 0.000000e+00 : f32
    %13 = vector.broadcast %cst_14 : f32 to vector<16x32xf32>
    %14 = arith.maximumf %12, %13 : vector<16x32xf32>
    %cst_15 = arith.constant dense<0.000000e+00> : vector<16x32xf32>
    %15 = tpu.matmul %14, %6, %cst_15 {dimension_numbers = #tpu.dot_dimension_numbers<[1], [0], [0], [1], [0, 0, 1, 1], [], []>} : vector<16x32xf32>, vector<32x32xf32>, vector<16x32xf32> -> vector<16x32xf32>
    %16 = vector.broadcast %7 : vector<1x32xf32> to vector<16x32xf32>
    %17 = arith.addf %15, %16 : vector<16x32xf32>
    %cst_16 = arith.constant 0.000000e+00 : f32
    %18 = vector.broadcast %cst_16 : f32 to vector<16x32xf32>
    %19 = arith.maximumf %17, %18 : vector<16x32xf32>
    %cst_17 = arith.constant dense<0.000000e+00> : vector<16x32xf32>
    %20 = tpu.matmul %19, %8, %cst_17 {dimension_numbers = #tpu.dot_dimension_numbers<[1], [0], [0], [1], [0, 0, 1, 1], [], []>} : vector<16x32xf32>, vector<32x32xf32>, vector<16x32xf32> -> vector<16x32xf32>
    %21 = vector.broadcast %9 : vector<1x32xf32> to vector<16x32xf32>
    %22 = arith.addf %20, %21 : vector<16x32xf32>
    %c0_18 = arith.constant 0 : index
    %c0_19 = arith.constant 0 : index
    %23 = vector.load %arg8[%c0_18, %c0_19] : memref<4x32xf32, #tpu.memory_space<vmem>>, vector<4x32xf32>
    %c0_20 = arith.constant 0 : index
    %c0_21 = arith.constant 0 : index
    %24 = vector.load %arg9[%c0_20, %c0_21] : memref<1x32xf32, #tpu.memory_space<vmem>>, vector<1x32xf32>
    %c0_22 = arith.constant 0 : index
    %c0_23 = arith.constant 0 : index
    %25 = vector.load %arg10[%c0_22, %c0_23] : memref<32x32xf32, #tpu.memory_space<vmem>>, vector<32x32xf32>
    %c0_24 = arith.constant 0 : index
    %c0_25 = arith.constant 0 : index
    %26 = vector.load %arg11[%c0_24, %c0_25] : memref<1x32xf32, #tpu.memory_space<vmem>>, vector<1x32xf32>
    %c0_26 = arith.constant 0 : index
    %c0_27 = arith.constant 0 : index
    %27 = vector.load %arg12[%c0_26, %c0_27] : memref<32x32xf32, #tpu.memory_space<vmem>>, vector<32x32xf32>
    %c0_28 = arith.constant 0 : index
    %c0_29 = arith.constant 0 : index
    %28 = vector.load %arg13[%c0_28, %c0_29] : memref<1x32xf32, #tpu.memory_space<vmem>>, vector<1x32xf32>
    %cst_30 = arith.constant dense<0.000000e+00> : vector<16x32xf32>
    %29 = tpu.matmul %3, %23, %cst_30 {dimension_numbers = #tpu.dot_dimension_numbers<[1], [0], [0], [1], [0, 0, 1, 1], [], []>} : vector<16x4xf32>, vector<4x32xf32>, vector<16x32xf32> -> vector<16x32xf32>
    %30 = vector.broadcast %24 : vector<1x32xf32> to vector<16x32xf32>
    %31 = arith.addf %29, %30 : vector<16x32xf32>
    %cst_31 = arith.constant 0.000000e+00 : f32
    %32 = vector.broadcast %cst_31 : f32 to vector<16x32xf32>
    %33 = arith.maximumf %31, %32 : vector<16x32xf32>
    %cst_32 = arith.constant dense<0.000000e+00> : vector<16x32xf32>
    %34 = tpu.matmul %33, %25, %cst_32 {dimension_numbers = #tpu.dot_dimension_numbers<[1], [0], [0], [1], [0, 0, 1, 1], [], []>} : vector<16x32xf32>, vector<32x32xf32>, vector<16x32xf32> -> vector<16x32xf32>
    %35 = vector.broadcast %26 : vector<1x32xf32> to vector<16x32xf32>
    %36 = arith.addf %34, %35 : vector<16x32xf32>
    %cst_33 = arith.constant 0.000000e+00 : f32
    %37 = vector.broadcast %cst_33 : f32 to vector<16x32xf32>
    %38 = arith.maximumf %36, %37 : vector<16x32xf32>
    %cst_34 = arith.constant dense<0.000000e+00> : vector<16x32xf32>
    %39 = tpu.matmul %38, %27, %cst_34 {dimension_numbers = #tpu.dot_dimension_numbers<[1], [0], [0], [1], [0, 0, 1, 1], [], []>} : vector<16x32xf32>, vector<32x32xf32>, vector<16x32xf32> -> vector<16x32xf32>
    %40 = vector.broadcast %28 : vector<1x32xf32> to vector<16x32xf32>
    %41 = arith.addf %39, %40 : vector<16x32xf32>
    %c0_35 = arith.constant 0 : index
    %c0_36 = arith.constant 0 : index
    %42 = vector.load %arg14[%c0_35, %c0_36] : memref<32x32xf32, #tpu.memory_space<vmem>>, vector<32x32xf32>
    %cst_37 = arith.constant dense<0.000000e+00> : vector<32x32xf32>
    %43 = tpu.matmul %22, %41, %cst_37 {dimension_numbers = #tpu.dot_dimension_numbers<[0], [0], [1], [1], [0, 1, 1, 1], [], []>} : vector<16x32xf32>, vector<16x32xf32>, vector<32x32xf32> -> vector<32x32xf32>
    %44 = arith.addf %42, %43 : vector<32x32xf32>
    %c0_38 = arith.constant 0 : index
    %c0_39 = arith.constant 0 : index
    %45 = vector.load %arg14[%c0_38, %c0_39] : memref<32x32xf32, #tpu.memory_space<vmem>>, vector<32x32xf32>
    tpu.vector_store %arg14[%c0_38, %c0_39], %44 {strides = array<i32>} : memref<32x32xf32, #tpu.memory_space<vmem>>, vector<32x32xf32>,
    return
  }
  func.func @transform_0(%arg0: i32) -> (i32, i32) {
    %c0_i32 = arith.constant 0 : i32
    %c0_i32_0 = arith.constant 0 : i32
    return %arg0, %c0_i32 : i32, i32
  }
  func.func @transform_1(%arg0: i32) -> (i32, i32) {
    %c0_i32 = arith.constant 0 : i32
    %c0_i32_0 = arith.constant 0 : i32
    %c0_i32_1 = arith.constant 0 : i32
    return %c0_i32, %c0_i32_0 : i32, i32
  }
  func.func @transform_2(%arg0: i32) -> (i32, i32) {
    %c0_i32 = arith.constant 0 : i32
    %c0_i32_0 = arith.constant 0 : i32
    %c0_i32_1 = arith.constant 0 : i32
    return %c0_i32, %c0_i32_0 : i32, i32
  }
  func.func @transform_3(%arg0: i32) -> (i32, i32) {
    %c0_i32 = arith.constant 0 : i32
    %c0_i32_0 = arith.constant 0 : i32
    %c0_i32_1 = arith.constant 0 : i32
    return %c0_i32, %c0_i32_0 : i32, i32
  }
  func.func @transform_4(%arg0: i32) -> (i32, i32) {
    %c0_i32 = arith.constant 0 : i32
    %c0_i32_0 = arith.constant 0 : i32
    %c0_i32_1 = arith.constant 0 : i32
    return %c0_i32, %c0_i32_0 : i32, i32
  }
  func.func @transform_5(%arg0: i32) -> (i32, i32) {
    %c0_i32 = arith.constant 0 : i32
    %c0_i32_0 = arith.constant 0 : i32
    %c0_i32_1 = arith.constant 0 : i32
    return %c0_i32, %c0_i32_0 : i32, i32
  }
  func.func @transform_6(%arg0: i32) -> (i32, i32) {
    %c0_i32 = arith.constant 0 : i32
    %c0_i32_0 = arith.constant 0 : i32
    %c0_i32_1 = arith.constant 0 : i32
    return %c0_i32, %c0_i32_0 : i32, i32
  }
  func.func @transform_7(%arg0: i32) -> (i32, i32) {
    %c0_i32 = arith.constant 0 : i32
    %c0_i32_0 = arith.constant 0 : i32
    %c0_i32_1 = arith.constant 0 : i32
    return %c0_i32, %c0_i32_0 : i32, i32
  }
  func.func @transform_8(%arg0: i32) -> (i32, i32) {
    %c0_i32 = arith.constant 0 : i32
    %c0_i32_0 = arith.constant 0 : i32
    %c0_i32_1 = arith.constant 0 : i32
    return %c0_i32, %c0_i32_0 : i32, i32
  }
  func.func @transform_9(%arg0: i32) -> (i32, i32) {
    %c0_i32 = arith.constant 0 : i32
    %c0_i32_0 = arith.constant 0 : i32
    %c0_i32_1 = arith.constant 0 : i32
    return %c0_i32, %c0_i32_0 : i32, i32
  }
  func.func @transform_10(%arg0: i32) -> (i32, i32) {
    %c0_i32 = arith.constant 0 : i32
    %c0_i32_0 = arith.constant 0 : i32
    %c0_i32_1 = arith.constant 0 : i32
    return %c0_i32, %c0_i32_0 : i32, i32
  }
  func.func @transform_11(%arg0: i32) -> (i32, i32) {
    %c0_i32 = arith.constant 0 : i32
    %c0_i32_0 = arith.constant 0 : i32
    %c0_i32_1 = arith.constant 0 : i32
    return %c0_i32, %c0_i32_0 : i32, i32
  }
  func.func @transform_12(%arg0: i32) -> (i32, i32) {
    %c0_i32 = arith.constant 0 : i32
    %c0_i32_0 = arith.constant 0 : i32
    %c0_i32_1 = arith.constant 0 : i32
    return %c0_i32, %c0_i32_0 : i32, i32
  }
  func.func @transform_13(%arg0: i32) -> (i32, i32) {
    %c0_i32 = arith.constant 0 : i32
    %c0_i32_0 = arith.constant 0 : i32
    %c0_i32_1 = arith.constant 0 : i32
    return %c0_i32, %c0_i32_0 : i32, i32
  }
}

module attributes {stable_mosaic.version = 11 : i64} {
  func.func @_output_kernel(%arg0: i32, %arg1: memref<32x32xf32, #tpu.memory_space<vmem>>, %arg2: memref<16x4xf32, #tpu.memory_space<vmem>>, %arg3: memref<4x32xf32, #tpu.memory_space<vmem>>, %arg4: memref<1x32xf32, #tpu.memory_space<vmem>>, %arg5: memref<32x32xf32, #tpu.memory_space<vmem>>, %arg6: memref<1x32xf32, #tpu.memory_space<vmem>>, %arg7: memref<32x32xf32, #tpu.memory_space<vmem>>, %arg8: memref<1x32xf32, #tpu.memory_space<vmem>>, %arg9: memref<32x32xf32, #tpu.memory_space<vmem>>, %arg10: memref<1x32xf32, #tpu.memory_space<vmem>>, %arg11: memref<32x4xf32, #tpu.memory_space<vmem>>, %arg12: memref<1x4xf32, #tpu.memory_space<vmem>>, %arg13: memref<16x4xf32, #tpu.memory_space<vmem>>) attributes {dimension_semantics = [#tpu.dimension_semantics<parallel>], iteration_bounds = array<i64: 1>, scalar_prefetch = 0 : i64, scratch_operands = 0 : i64, tpu.core_type = #tpu.core_type<tc>, window_params = [{pipeline_mode = #tpu.pipeline_mode<synchronous>, transform_indices = @transform_0, window_bounds = array<i64: 32, 32>}, {transform_indices = @transform_1, window_bounds = array<i64: 16, 4>}, {pipeline_mode = #tpu.pipeline_mode<synchronous>, transform_indices = @transform_2, window_bounds = array<i64: 4, 32>}, {pipeline_mode = #tpu.pipeline_mode<synchronous>, transform_indices = @transform_3, window_bounds = array<i64: 1, 32>}, {pipeline_mode = #tpu.pipeline_mode<synchronous>, transform_indices = @transform_4, window_bounds = array<i64: 32, 32>}, {pipeline_mode = #tpu.pipeline_mode<synchronous>, transform_indices = @transform_5, window_bounds = array<i64: 1, 32>}, {pipeline_mode = #tpu.pipeline_mode<synchronous>, transform_indices = @transform_6, window_bounds = array<i64: 32, 32>}, {pipeline_mode = #tpu.pipeline_mode<synchronous>, transform_indices = @transform_7, window_bounds = array<i64: 1, 32>}, {pipeline_mode = #tpu.pipeline_mode<synchronous>, transform_indices = @transform_8, window_bounds = array<i64: 32, 32>}, {pipeline_mode = #tpu.pipeline_mode<synchronous>, transform_indices = @transform_9, window_bounds = array<i64: 1, 32>}, {pipeline_mode = #tpu.pipeline_mode<synchronous>, transform_indices = @transform_10, window_bounds = array<i64: 32, 4>}, {pipeline_mode = #tpu.pipeline_mode<synchronous>, transform_indices = @transform_11, window_bounds = array<i64: 1, 4>}, {transform_indices = @transform_12, window_bounds = array<i64: 16, 4>}]} {
    %c0 = arith.constant 0 : index
    %c0_0 = arith.constant 0 : index
    %0 = vector.load %arg1[%c0, %c0_0] : memref<32x32xf32, #tpu.memory_space<vmem>>, vector<32x32xf32>
    %cst = arith.constant dense<0xFF800000> : vector<32xf32>
    %1 = vector.multi_reduction <maximumf>, %0, %cst [1] : vector<32x32xf32> to vector<32xf32>
    %2 = vector.shape_cast %1 : vector<32xf32> to vector<32x1xf32>
    %3 = vector.broadcast %2 : vector<32x1xf32> to vector<32x32xf32>
    %4 = arith.subf %0, %3 : vector<32x32xf32>
    %5 = math.exp %4 : vector<32x32xf32>
    %cst_1 = arith.constant dense<0.000000e+00> : vector<32xf32>
    %6 = vector.multi_reduction <add>, %5, %cst_1 [1] : vector<32x32xf32> to vector<32xf32>
    %7 = vector.shape_cast %6 : vector<32xf32> to vector<32x1xf32>
    %8 = vector.broadcast %7 : vector<32x1xf32> to vector<32x32xf32>
    %9 = arith.divf %5, %8 : vector<32x32xf32>
    %c0_2 = arith.constant 0 : index
    %c0_3 = arith.constant 0 : index
    %10 = vector.load %arg2[%c0_2, %c0_3] : memref<16x4xf32, #tpu.memory_space<vmem>>, vector<16x4xf32>
    %c0_4 = arith.constant 0 : index
    %c0_5 = arith.constant 0 : index
    %11 = vector.load %arg3[%c0_4, %c0_5] : memref<4x32xf32, #tpu.memory_space<vmem>>, vector<4x32xf32>
    %c0_6 = arith.constant 0 : index
    %c0_7 = arith.constant 0 : index
    %12 = vector.load %arg4[%c0_6, %c0_7] : memref<1x32xf32, #tpu.memory_space<vmem>>, vector<1x32xf32>
    %c0_8 = arith.constant 0 : index
    %c0_9 = arith.constant 0 : index
    %13 = vector.load %arg5[%c0_8, %c0_9] : memref<32x32xf32, #tpu.memory_space<vmem>>, vector<32x32xf32>
    %c0_10 = arith.constant 0 : index
    %c0_11 = arith.constant 0 : index
    %14 = vector.load %arg6[%c0_10, %c0_11] : memref<1x32xf32, #tpu.memory_space<vmem>>, vector<1x32xf32>
    %c0_12 = arith.constant 0 : index
    %c0_13 = arith.constant 0 : index
    %15 = vector.load %arg7[%c0_12, %c0_13] : memref<32x32xf32, #tpu.memory_space<vmem>>, vector<32x32xf32>
    %c0_14 = arith.constant 0 : index
    %c0_15 = arith.constant 0 : index
    %16 = vector.load %arg8[%c0_14, %c0_15] : memref<1x32xf32, #tpu.memory_space<vmem>>, vector<1x32xf32>
    %cst_16 = arith.constant dense<0.000000e+00> : vector<16x32xf32>
    %17 = tpu.matmul %10, %11, %cst_16 {dimension_numbers = #tpu.dot_dimension_numbers<[1], [0], [0], [1], [0, 0, 1, 1], [], []>} : vector<16x4xf32>, vector<4x32xf32>, vector<16x32xf32> -> vector<16x32xf32>
    %18 = vector.broadcast %12 : vector<1x32xf32> to vector<16x32xf32>
    %19 = arith.addf %17, %18 : vector<16x32xf32>
    %cst_17 = arith.constant 0.000000e+00 : f32
    %20 = vector.broadcast %cst_17 : f32 to vector<16x32xf32>
    %21 = arith.maximumf %19, %20 : vector<16x32xf32>
    %cst_18 = arith.constant dense<0.000000e+00> : vector<16x32xf32>
    %22 = tpu.matmul %21, %13, %cst_18 {dimension_numbers = #tpu.dot_dimension_numbers<[1], [0], [0], [1], [0, 0, 1, 1], [], []>} : vector<16x32xf32>, vector<32x32xf32>, vector<16x32xf32> -> vector<16x32xf32>
    %23 = vector.broadcast %14 : vector<1x32xf32> to vector<16x32xf32>
    %24 = arith.addf %22, %23 : vector<16x32xf32>
    %cst_19 = arith.constant 0.000000e+00 : f32
    %25 = vector.broadcast %cst_19 : f32 to vector<16x32xf32>
    %26 = arith.maximumf %24, %25 : vector<16x32xf32>
    %cst_20 = arith.constant dense<0.000000e+00> : vector<16x32xf32>
    %27 = tpu.matmul %26, %15, %cst_20 {dimension_numbers = #tpu.dot_dimension_numbers<[1], [0], [0], [1], [0, 0, 1, 1], [], []>} : vector<16x32xf32>, vector<32x32xf32>, vector<16x32xf32> -> vector<16x32xf32>
    %28 = vector.broadcast %16 : vector<1x32xf32> to vector<16x32xf32>
    %29 = arith.addf %27, %28 : vector<16x32xf32>
    %cst_21 = arith.constant dense<0.000000e+00> : vector<16x32xf32>
    %30 = tpu.matmul %29, %9, %cst_21 {dimension_numbers = #tpu.dot_dimension_numbers<[1], [1], [0], [0], [0, 0, 1, 0], [], []>} : vector<16x32xf32>, vector<32x32xf32>, vector<16x32xf32> -> vector<16x32xf32>
    %c0_22 = arith.constant 0 : index
    %c0_23 = arith.constant 0 : index
    %31 = vector.load %arg9[%c0_22, %c0_23] : memref<32x32xf32, #tpu.memory_space<vmem>>, vector<32x32xf32>
    %cst_24 = arith.constant dense<0.000000e+00> : vector<16x32xf32>
    %32 = tpu.matmul %30, %31, %cst_24 {dimension_numbers = #tpu.dot_dimension_numbers<[1], [0], [0], [1], [0, 0, 1, 1], [], []>} : vector<16x32xf32>, vector<32x32xf32>, vector<16x32xf32> -> vector<16x32xf32>
    %c0_25 = arith.constant 0 : index
    %c0_26 = arith.constant 0 : index
    %33 = vector.load %arg10[%c0_25, %c0_26] : memref<1x32xf32, #tpu.memory_space<vmem>>, vector<1x32xf32>
    %34 = vector.broadcast %33 : vector<1x32xf32> to vector<16x32xf32>
    %35 = arith.addf %32, %34 : vector<16x32xf32>
    %cst_27 = arith.constant 0.000000e+00 : f32
    %36 = vector.broadcast %cst_27 : f32 to vector<16x32xf32>
    %37 = arith.maximumf %35, %36 : vector<16x32xf32>
    %c0_28 = arith.constant 0 : index
    %c0_29 = arith.constant 0 : index
    %38 = vector.load %arg11[%c0_28, %c0_29] : memref<32x4xf32, #tpu.memory_space<vmem>>, vector<32x4xf32>
    %cst_30 = arith.constant dense<0.000000e+00> : vector<16x4xf32>
    %39 = tpu.matmul %37, %38, %cst_30 {dimension_numbers = #tpu.dot_dimension_numbers<[1], [0], [0], [1], [0, 0, 1, 1], [], []>} : vector<16x32xf32>, vector<32x4xf32>, vector<16x4xf32> -> vector<16x4xf32>
    %c0_31 = arith.constant 0 : index
    %c0_32 = arith.constant 0 : index
    %40 = vector.load %arg12[%c0_31, %c0_32] : memref<1x4xf32, #tpu.memory_space<vmem>>, vector<1x4xf32>
    %41 = vector.broadcast %40 : vector<1x4xf32> to vector<16x4xf32>
    %42 = arith.addf %39, %41 : vector<16x4xf32>
    %c0_33 = arith.constant 0 : index
    %c0_34 = arith.constant 0 : index
    %43 = vector.load %arg13[%c0_33, %c0_34] : memref<16x4xf32, #tpu.memory_space<vmem>>, vector<16x4xf32>
    tpu.vector_store %arg13[%c0_33, %c0_34], %42 {strides = array<i32>} : memref<16x4xf32, #tpu.memory_space<vmem>>, vector<16x4xf32>,
    return
  }
  func.func @transform_0(%arg0: i32) -> (i32, i32) {
    %c0_i32 = arith.constant 0 : i32
    %c0_i32_0 = arith.constant 0 : i32
    %c0_i32_1 = arith.constant 0 : i32
    return %c0_i32, %c0_i32_0 : i32, i32
  }
  func.func @transform_1(%arg0: i32) -> (i32, i32) {
    %c0_i32 = arith.constant 0 : i32
    %c0_i32_0 = arith.constant 0 : i32
    return %arg0, %c0_i32 : i32, i32
  }
  func.func @transform_2(%arg0: i32) -> (i32, i32) {
    %c0_i32 = arith.constant 0 : i32
    %c0_i32_0 = arith.constant 0 : i32
    %c0_i32_1 = arith.constant 0 : i32
    return %c0_i32, %c0_i32_0 : i32, i32
  }
  func.func @transform_3(%arg0: i32) -> (i32, i32) {
    %c0_i32 = arith.constant 0 : i32
    %c0_i32_0 = arith.constant 0 : i32
    %c0_i32_1 = arith.constant 0 : i32
    return %c0_i32, %c0_i32_0 : i32, i32
  }
  func.func @transform_4(%arg0: i32) -> (i32, i32) {
    %c0_i32 = arith.constant 0 : i32
    %c0_i32_0 = arith.constant 0 : i32
    %c0_i32_1 = arith.constant 0 : i32
    return %c0_i32, %c0_i32_0 : i32, i32
  }
  func.func @transform_5(%arg0: i32) -> (i32, i32) {
    %c0_i32 = arith.constant 0 : i32
    %c0_i32_0 = arith.constant 0 : i32
    %c0_i32_1 = arith.constant 0 : i32
    return %c0_i32, %c0_i32_0 : i32, i32
  }
  func.func @transform_6(%arg0: i32) -> (i32, i32) {
    %c0_i32 = arith.constant 0 : i32
    %c0_i32_0 = arith.constant 0 : i32
    %c0_i32_1 = arith.constant 0 : i32
    return %c0_i32, %c0_i32_0 : i32, i32
  }
  func.func @transform_7(%arg0: i32) -> (i32, i32) {
    %c0_i32 = arith.constant 0 : i32
    %c0_i32_0 = arith.constant 0 : i32
    %c0_i32_1 = arith.constant 0 : i32
    return %c0_i32, %c0_i32_0 : i32, i32
  }
  func.func @transform_8(%arg0: i32) -> (i32, i32) {
    %c0_i32 = arith.constant 0 : i32
    %c0_i32_0 = arith.constant 0 : i32
    %c0_i32_1 = arith.constant 0 : i32
    return %c0_i32, %c0_i32_0 : i32, i32
  }
  func.func @transform_9(%arg0: i32) -> (i32, i32) {
    %c0_i32 = arith.constant 0 : i32
    %c0_i32_0 = arith.constant 0 : i32
    %c0_i32_1 = arith.constant 0 : i32
    return %c0_i32, %c0_i32_0 : i32, i32
  }
  func.func @transform_10(%arg0: i32) -> (i32, i32) {
    %c0_i32 = arith.constant 0 : i32
    %c0_i32_0 = arith.constant 0 : i32
    %c0_i32_1 = arith.constant 0 : i32
    return %c0_i32, %c0_i32_0 : i32, i32
  }
  func.func @transform_11(%arg0: i32) -> (i32, i32) {
    %c0_i32 = arith.constant 0 : i32
    %c0_i32_0 = arith.constant 0 : i32
    %c0_i32_1 = arith.constant 0 : i32
    return %c0_i32, %c0_i32_0 : i32, i32
  }
  func.func @transform_12(%arg0: i32) -> (i32, i32) {
    %c0_i32 = arith.constant 0 : i32
    %c0_i32_0 = arith.constant 0 : i32
    return %arg0, %c0_i32 : i32, i32
  }
}

</mosaic_0001>

<llo_original>
// kernel: mlp_forward.2
$region0: #{mlp_forward.2}
  #allocation0 [shape = 'u32[]', space=smem, size = 0x4, offset = 0x4, fixed_abs, tag = 'smem constant byte address 0x4 - core index']
  #allocation1 [shape = 'u32[144,128]{1,0:T(1,128)}', space=vmem, size = 0x12000, scoped, tag = 'internal scratch']
  %s0 = inlined_call_operand.vmem [shape: f32[16,4], index: 0, kind: input, shape index: {}]
  %s1 = inlined_call_operand.hbm [shape: f32[4,32], index: 1, kind: input, shape index: {}]
  %s2 = inlined_call_operand.vmem [shape: f32[1,32], index: 2, kind: input, shape index: {}]
  %s3 = inlined_call_operand.vmem [shape: f32[32,32], index: 3, kind: input, shape index: {}]
  %s4 = inlined_call_operand.vmem [shape: f32[1,32], index: 4, kind: input, shape index: {}]
  %s5 = inlined_call_operand.vmem [shape: f32[32,32], index: 5, kind: input, shape index: {}]
  %s6 = inlined_call_operand.hbm [shape: f32[1,32], index: 6, kind: input, shape index: {}]
  %s7 = inlined_call_operand.hbm [shape: f32[4,32], index: 7, kind: input, shape index: {}]
  %s8 = inlined_call_operand.vmem [shape: f32[1,32], index: 8, kind: input, shape index: {}]
  %s9 = inlined_call_operand.vmem [shape: f32[32,32], index: 9, kind: input, shape index: {}]
  %s10 = inlined_call_operand.hbm [shape: f32[1,32], index: 10, kind: input, shape index: {}]
  %s11 = inlined_call_operand.hbm [shape: f32[32,32], index: 11, kind: input, shape index: {}]
  %s12 = inlined_call_operand.hbm [shape: f32[1,32], index: 12, kind: input, shape index: {}]
  %s13 = inlined_call_operand.vmem [shape: f32[32,32], index: 13, kind: output, shape index: {}]
  %s14 = sld [smem:[#allocation0]]
  $region90: #{mlp_forward.2} parent=0
    _
  %s16 = ssub.s32 1, %s14
  %s17 = scalar_select 0, %s16, %s14
  $region1: #{mlp_forward.2} parent=0
    #allocation2 [shape = 'u8[2048]{0}', space=vmem, size = 0x800, scoped, tag = 'input window, operand 1, single buffered']
    #allocation3 [shape = 's32[1]{0}', space=sflag, size = 0x4, scoped, tag = 'scoped memory for mlp_forward.2']
    #allocation4 [shape = 'u8[512]{0}', space=vmem, size = 0x400, scoped, tag = 'input window, operand 6, single buffered']
    #allocation5 [shape = 's32[1]{0}', space=sflag, size = 0x4, scoped, tag = 'scoped memory for mlp_forward.2']
    #allocation6 [shape = 'u8[2048]{0}', space=vmem, size = 0x800, scoped, tag = 'input window, operand 7, single buffered']
    #allocation7 [shape = 'u8[512]{0}', space=vmem, size = 0x400, scoped, tag = 'input window, operand 10, single buffered']
    #allocation8 [shape = 's32[1]{0}', space=sflag, size = 0x4, scoped, tag = 'scoped memory for mlp_forward.2']
    #allocation9 [shape = 'u8[16384]{0}', space=vmem, size = 0x4000, scoped, tag = 'input window, operand 11, single buffered']
    #allocation10 [shape = 'u8[512]{0}', space=vmem, size = 0x400, scoped, tag = 'input window, operand 12, single buffered']
    #allocation11 [shape = 's32[1]{0}', space=sflag, size = 0x4, scoped, tag = 'scoped memory for mlp_forward.2']
    %18 = vsyncpa [#allocation3], 0
    %19 = vsyncpa [#allocation5], 0
    %20 = vsyncpa [#allocation8], 0
    %21 = vsyncpa [#allocation11], 0
    // Predicated region
    $region2: #{mlp_forward.2} parent=1 // pred_check
      _
    $region3: #{mlp_forward.2} parent=1 // pred_check_branch
      %23 = sbr.rel (0) target = $region5
    $region4: #{mlp_forward.2} parent=1 // pred_region
      _
    $region5: #{mlp_forward.2} parent=1 // pred_fallthru
      _
    // Predicated region
    $region6: #{mlp_forward.2} parent=1 // pred_check
      _
    $region7: #{mlp_forward.2} parent=1 // pred_check_branch
      %25 = sbr.rel (0) target = $region9
    $region8: #{mlp_forward.2} parent=1 // pred_region
      %s27 = ssub.s32 64, 64
      %28 = vsyncadd [#allocation3], %s27
      %s30 = sshll.u32 [#allocation2], 4
      %s31 = int_to_ptr.vmem [resolvable:$true] %s30
      %33 = dma.hbm_to_vmem [thread:$0]  %s1, 64, %s31, [#allocation3]
    $region9: #{mlp_forward.2} parent=1 // pred_fallthru
      _
    // Predicated region
    $region10: #{mlp_forward.2} parent=1 // pred_check
      _
    $region11: #{mlp_forward.2} parent=1 // pred_check_branch
      %35 = sbr.rel (0) target = $region13
    $region12: #{mlp_forward.2} parent=1 // pred_region
      _
    $region13: #{mlp_forward.2} parent=1 // pred_fallthru
      _
    // Predicated region
    $region14: #{mlp_forward.2} parent=1 // pred_check
      _
    $region15: #{mlp_forward.2} parent=1 // pred_check_branch
      %37 = sbr.rel (0) target = $region17
    $region16: #{mlp_forward.2} parent=1 // pred_region
      _
    $region17: #{mlp_forward.2} parent=1 // pred_fallthru
      _
    // Predicated region
    $region18: #{mlp_forward.2} parent=1 // pred_check
      _
    $region19: #{mlp_forward.2} parent=1 // pred_check_branch
      %39 = sbr.rel (0) target = $region21
    $region20: #{mlp_forward.2} parent=1 // pred_region
      _
    $region21: #{mlp_forward.2} parent=1 // pred_fallthru
      _
    // Predicated region
    $region22: #{mlp_forward.2} parent=1 // pred_check
      _
    $region23: #{mlp_forward.2} parent=1 // pred_check_branch
      %41 = sbr.rel (0) target = $region25
    $region24: #{mlp_forward.2} parent=1 // pred_region
      _
    $region25: #{mlp_forward.2} parent=1 // pred_fallthru
      _
    // Predicated region
    $region26: #{mlp_forward.2} parent=1 // pred_check
      _
    $region27: #{mlp_forward.2} parent=1 // pred_check_branch
      %43 = sbr.rel (0) target = $region29
    $region28: #{mlp_forward.2} parent=1 // pred_region
      %s45 = ssub.s32 16, 16
      %46 = vsyncadd [#allocation5], %s45
      %s48 = sshll.u32 [#allocation4], 4
      %s49 = int_to_ptr.vmem [resolvable:$true] %s48
      %51 = dma.hbm_to_vmem [thread:$0]  %s6, 16, %s49, [#allocation5]
    $region29: #{mlp_forward.2} parent=1 // pred_fallthru
      _
    // Predicated region
    $region30: #{mlp_forward.2} parent=1 // pred_check
      _
    $region31: #{mlp_forward.2} parent=1 // pred_check_branch
      %53 = sbr.rel (0) target = $region33
    $region32: #{mlp_forward.2} parent=1 // pred_region
      %s55 = ssub.s32 64, 64
      %56 = vsyncadd [#allocation5], %s55
      %s58 = sshll.u32 [#allocation6], 4
      %s59 = int_to_ptr.vmem [resolvable:$true] %s58
      %61 = dma.hbm_to_vmem [thread:$0]  %s7, 64, %s59, [#allocation5]
    $region33: #{mlp_forward.2} parent=1 // pred_fallthru
      _
    // Predicated region
    $region34: #{mlp_forward.2} parent=1 // pred_check
      _
    $region35: #{mlp_forward.2} parent=1 // pred_check_branch
      %63 = sbr.rel (0) target = $region37
    $region36: #{mlp_forward.2} parent=1 // pred_region
      _
    $region37: #{mlp_forward.2} parent=1 // pred_fallthru
      _
    // Predicated region
    $region38: #{mlp_forward.2} parent=1 // pred_check
      _
    $region39: #{mlp_forward.2} parent=1 // pred_check_branch
      %65 = sbr.rel (0) target = $region41
    $region40: #{mlp_forward.2} parent=1 // pred_region
      _
    $region41: #{mlp_forward.2} parent=1 // pred_fallthru
      _
    // Predicated region
    $region42: #{mlp_forward.2} parent=1 // pred_check
      _
    $region43: #{mlp_forward.2} parent=1 // pred_check_branch
      %67 = sbr.rel (0) target = $region45
    $region44: #{mlp_forward.2} parent=1 // pred_region
      %s69 = ssub.s32 16, 16
      %70 = vsyncadd [#allocation8], %s69
      %s72 = sshll.u32 [#allocation7], 4
      %s73 = int_to_ptr.vmem [resolvable:$true] %s72
      %75 = dma.hbm_to_vmem [thread:$0]  %s10, 16, %s73, [#allocation8]
    $region45: #{mlp_forward.2} parent=1 // pred_fallthru
      _
    // Predicated region
    $region46: #{mlp_forward.2} parent=1 // pred_check
      _
    $region47: #{mlp_forward.2} parent=1 // pred_check_branch
      %77 = sbr.rel (0) target = $region49
    $region48: #{mlp_forward.2} parent=1 // pred_region
      %s79 = ssub.s32 512, 512
      %80 = vsyncadd [#allocation8], %s79
      %s81 = sshll.u32 [#allocation9], 4
      %s82 = int_to_ptr.vmem [resolvable:$true] %s81
      %87 = dma.hbm_to_vmem [thread:$0]  %s11, 512, %s82, [#allocation8], 128, 128, 8
    $region49: #{mlp_forward.2} parent=1 // pred_fallthru
      _
    // Predicated region
    $region50: #{mlp_forward.2} parent=1 // pred_check
      _
    $region51: #{mlp_forward.2} parent=1 // pred_check_branch
      %89 = sbr.rel (0) target = $region53
    $region52: #{mlp_forward.2} parent=1 // pred_region
      %s91 = ssub.s32 16, 16
      %92 = vsyncadd [#allocation11], %s91
      %s94 = sshll.u32 [#allocation10], 4
      %s95 = int_to_ptr.vmem [resolvable:$true] %s94
      %97 = dma.hbm_to_vmem [thread:$0]  %s12, 16, %s95, [#allocation11]
    $region53: #{mlp_forward.2} parent=1 // pred_fallthru
      _
    // Predicated region
    $region54: #{mlp_forward.2} parent=1 // pred_check
      _
    $region55: #{mlp_forward.2} parent=1 // pred_check_branch
      %99 = sbr.rel (0) target = $region57
    $region56: #{mlp_forward.2} parent=1 // pred_region
      %100 = dma.done [#allocation3], 64
    $region57: #{mlp_forward.2} parent=1 // pred_fallthru
      _
    // Predicated region
    $region58: #{mlp_forward.2} parent=1 // pred_check
      _
    $region59: #{mlp_forward.2} parent=1 // pred_check_branch
      %102 = sbr.rel (0) target = $region61
    $region60: #{mlp_forward.2} parent=1 // pred_region
      %103 = dma.done [#allocation5], 16
    $region61: #{mlp_forward.2} parent=1 // pred_fallthru
      _
    // Predicated region
    $region62: #{mlp_forward.2} parent=1 // pred_check
      _
    $region63: #{mlp_forward.2} parent=1 // pred_check_branch
      %105 = sbr.rel (0) target = $region65
    $region64: #{mlp_forward.2} parent=1 // pred_region
      %106 = dma.done [#allocation5], 64
    $region65: #{mlp_forward.2} parent=1 // pred_fallthru
      _
    // Predicated region
    $region66: #{mlp_forward.2} parent=1 // pred_check
      _
    $region67: #{mlp_forward.2} parent=1 // pred_check_branch
      %108 = sbr.rel (0) target = $region69
    $region68: #{mlp_forward.2} parent=1 // pred_region
      %109 = dma.done [#allocation8], 16
    $region69: #{mlp_forward.2} parent=1 // pred_fallthru
      _
    // Predicated region
    $region70: #{mlp_forward.2} parent=1 // pred_check
      _
    $region71: #{mlp_forward.2} parent=1 // pred_check_branch
      %111 = sbr.rel (0) target = $region73
    $region72: #{mlp_forward.2} parent=1 // pred_region
      %112 = dma.done [#allocation8], 512
    $region73: #{mlp_forward.2} parent=1 // pred_fallthru
      _
    // Predicated region
    $region74: #{mlp_forward.2} parent=1 // pred_check
      _
    $region75: #{mlp_forward.2} parent=1 // pred_check_branch
      %114 = sbr.rel (0) target = $region77
    $region76: #{mlp_forward.2} parent=1 // pred_region
      %115 = dma.done [#allocation11], 16
    $region77: #{mlp_forward.2} parent=1 // pred_fallthru
      _
    %p116 = scmp.eq.s32.totalorder 0, 0
    // Predicated region
    $region78: #{mlp_forward.2} parent=1 // pred_check
      %p117 = pneg %p116
    $region79: #{mlp_forward.2} parent=1 // pred_check_branch
      %119 = sbr.rel (%p117) target = $region81
    $region80: #{mlp_forward.2} parent=1 // pred_region
      %vm120 = vcmask 261120
      %121 = vst.msk [vmem:[%s13] sm:$0xff] %vm120, 0.0
      %122 = vst.msk [vmem:[%s13 + $0x8] sm:$0xff] %vm120, 0.0
      %123 = vst.msk [vmem:[%s13 + $0x10] sm:$0xff] %vm120, 0.0
      %124 = vst.msk [vmem:[%s13 + $0x18] sm:$0xff] %vm120, 0.0
    $region81: #{mlp_forward.2} parent=1 // pred_fallthru
      _
    %v125 = vld [vmem:[%s0] sm:$0xff]
    %v126 = vld [vmem:[%s0 + $0x8] sm:$0xff]
    %v127 = vld [vmem:[#allocation2] sm:$0xf]
    %v128 = vld [vmem:[%s2] sm:$0x1]
    %v129 = vld [vmem:[%s3] sm:$0xff]
    %v130 = vld [vmem:[%s3 + $0x8] sm:$0xff]
    %v131 = vld [vmem:[%s3 + $0x10] sm:$0xff]
    %v132 = vld [vmem:[%s3 + $0x18] sm:$0xff]
    %v133 = vld [vmem:[%s4] sm:$0x1]
    %v134 = vld [vmem:[%s5] sm:$0xff]
    %v135 = vld [vmem:[%s5 + $0x8] sm:$0xff]
    %v136 = vld [vmem:[%s5 + $0x10] sm:$0xff]
    %v137 = vld [vmem:[%s5 + $0x18] sm:$0xff]
    %v138 = vld [vmem:[#allocation4] sm:$0x1]
    %v140 = vlaneseq
    %v141 = vshrl.u32 %v140, 7
    %v142 = vsub.s32 0, %v141
    %v143 = vrot.slane %v128, %v142
    %vm145 = vcmask 31744
    %v147 = vsel %vm145, %v125, 0
    %v150 = vsel %vm145, %v126, 0
    %vm152 = vcmask 1043456
    %v154 = vsel %vm152, %v127, 0
    %156 = vmatprep.subr.mxu0 0.0
    %157 = vmatpush1.msra.mxu0 %v154
    %158 = vmatprep.subr.mxu0 0.0
    %159 = vmatpush1.msra.mxu0 0.0
    %160 = vmatprep.subr.mxu0 0.0
    %161 = vmatpush1.msra.mxu0 0.0
    %162 = vmatprep.subr.mxu0 0.0
    %163 = vmatpush1.msra.mxu0 0.0
    %164 = vmatprep.subr.mxu0 0.0
    %165 = vmatpush1.msra.mxu0 0.0
    %166 = vmatprep.subr.mxu0 0.0
    %167 = vmatpush1.msra.mxu0 0.0
    %168 = vmatprep.subr.mxu0 0.0
    %169 = vmatpush1.msra.mxu0 0.0
    %170 = vmatprep.subr.mxu0 0.0
    %171 = vmatpush1.msra.mxu0 0.0
    %172 = vmatprep.subr.mxu0 0.0
    %173 = vmatpush1.msra.mxu0 0.0
    %174 = vmatprep.subr.mxu0 0.0
    %175 = vmatpush1.msra.mxu0 0.0
    %176 = vmatprep.subr.mxu0 0.0
    %177 = vmatpush1.msra.mxu0 0.0
    %178 = vmatprep.subr.mxu0 0.0
    %179 = vmatpush1.msra.mxu0 0.0
    %180 = vmatprep.subr.mxu0 0.0
    %181 = vmatpush1.msra.mxu0 0.0
    %182 = vmatprep.subr.mxu0 0.0
    %183 = vmatpush1.msra.mxu0 0.0
    %184 = vmatprep.subr.mxu0 0.0
    %185 = vmatpush1.msra.mxu0 0.0
    %186 = vmatprep.subr.mxu0 0.0
    %187 = vmatpush1.msra.mxu0 0.0
    %188 = vmatprep.subr.mxu0 0.0
    %189 = vmatpush1.msra.mxu0 0.0
    %190 = vmatprep.subr.mxu0 0.0
    %191 = vmatpush1.msra.mxu0 0.0
    %192 = vmatprep.subr.mxu0 0.0
    %193 = vmatpush1.msra.mxu0 0.0
    %194 = vmatprep.subr.mxu0 0.0
    %195 = vmatpush1.msra.mxu0 0.0
    %196 = vmatprep.subr.mxu0 0.0
    %197 = vmatpush1.msra.mxu0 0.0
    %198 = vmatprep.subr.mxu0 0.0
    %199 = vmatpush1.msra.mxu0 0.0
    %200 = vmatprep.subr.mxu0 0.0
    %201 = vmatpush1.msra.mxu0 0.0
    %202 = vmatprep.subr.mxu0 0.0
    %203 = vmatpush1.msra.mxu0 0.0
    %204 = vmatprep.subr.mxu0 0.0
    %205 = vmatpush1.msra.mxu0 0.0
    %206 = vmatprep.subr.mxu0 0.0
    %207 = vmatpush1.msra.mxu0 0.0
    %208 = vmatprep.subr.mxu0 0.0
    %209 = vmatpush1.msra.mxu0 0.0
    %210 = vmatprep.subr.mxu0 0.0
    %211 = vmatpush1.msra.mxu0 0.0
    %212 = vmatprep.subr.mxu0 0.0
    %213 = vmatpush1.msra.mxu0 0.0
    %214 = vmatprep.subr.mxu0 0.0
    %215 = vmatpush1.msra.mxu0 0.0
    %216 = vmatprep.subr.mxu0 0.0
    %217 = vmatpush1.msra.mxu0 0.0
    %218 = vmatprep.subr.mxu0 0.0
    %219 = vmatpush1.msra.mxu0 0.0
    %220 = vmatprep.mubr.f32.mxu0 0.0
    %221 = vmatmul.mubr.f32.gmra.mrb[0].mxu0 %v147
    %v222 = vpop.f32.mrb[0].mxu0
    %v223 = vadd.f32 %v143, %v222
    %v224 = vpop.f32.mrb[0].mxu0
    %225 = vmatprep.mubr.f32.mxu0 0.0
    %226 = vmatmul.mubr.f32.gmra.mrb[0].mxu0 %v150
    %v227 = vpop.f32.mrb[0].mxu0
    %v228 = vadd.f32 %v143, %v227
    %v229 = vpop.f32.mrb[0].mxu0
    %230 = vdwg.mxu0
    %v231 = vmax.f32 %v223, 0.0
    %v232 = vmax.f32 %v228, 0.0
    %v234 = vlaneseq
    %v235 = vshrl.u32 %v234, 7
    %v236 = vsub.s32 0, %v235
    %v237 = vrot.slane %v133, %v236
    %vm239 = vcmask 261120
    %v241 = vsel %vm239, %v231, 0
    %v244 = vsel %vm239, %v232, 0
    %246 = vmatprep.subr.mxu0 0.0
    %247 = vmatpush1.msra.mxu0 %v129
    %248 = vmatprep.subr.mxu0 0.0
    %249 = vmatpush1.msra.mxu0 %v130
    %250 = vmatprep.subr.mxu0 0.0
    %251 = vmatpush1.msra.mxu0 %v131
    %252 = vmatprep.subr.mxu0 0.0
    %253 = vmatpush1.msra.mxu0 %v132
    %254 = vmatprep.subr.mxu0 0.0
    %255 = vmatpush1.msra.mxu0 0.0
    %256 = vmatprep.subr.mxu0 0.0
    %257 = vmatpush1.msra.mxu0 0.0
    %258 = vmatprep.subr.mxu0 0.0
    %259 = vmatpush1.msra.mxu0 0.0
    %260 = vmatprep.subr.mxu0 0.0
    %261 = vmatpush1.msra.mxu0 0.0
    %262 = vmatprep.subr.mxu0 0.0
    %263 = vmatpush1.msra.mxu0 0.0
    %264 = vmatprep.subr.mxu0 0.0
    %265 = vmatpush1.msra.mxu0 0.0
    %266 = vmatprep.subr.mxu0 0.0
    %267 = vmatpush1.msra.mxu0 0.0
    %268 = vmatprep.subr.mxu0 0.0
    %269 = vmatpush1.msra.mxu0 0.0
    %270 = vmatprep.subr.mxu0 0.0
    %271 = vmatpush1.msra.mxu0 0.0
    %272 = vmatprep.subr.mxu0 0.0
    %273 = vmatpush1.msra.mxu0 0.0
    %274 = vmatprep.subr.mxu0 0.0
    %275 = vmatpush1.msra.mxu0 0.0
    %276 = vmatprep.subr.mxu0 0.0
    %277 = vmatpush1.msra.mxu0 0.0
    %278 = vmatprep.subr.mxu0 0.0
    %279 = vmatpush1.msra.mxu0 0.0
    %280 = vmatprep.subr.mxu0 0.0
    %281 = vmatpush1.msra.mxu0 0.0
    %282 = vmatprep.subr.mxu0 0.0
    %283 = vmatpush1.msra.mxu0 0.0
    %284 = vmatprep.subr.mxu0 0.0
    %285 = vmatpush1.msra.mxu0 0.0
    %286 = vmatprep.subr.mxu0 0.0
    %287 = vmatpush1.msra.mxu0 0.0
    %288 = vmatprep.subr.mxu0 0.0
    %289 = vmatpush1.msra.mxu0 0.0
    %290 = vmatprep.subr.mxu0 0.0
    %291 = vmatpush1.msra.mxu0 0.0
    %292 = vmatprep.subr.mxu0 0.0
    %293 = vmatpush1.msra.mxu0 0.0
    %294 = vmatprep.subr.mxu0 0.0
    %295 = vmatpush1.msra.mxu0 0.0
    %296 = vmatprep.subr.mxu0 0.0
    %297 = vmatpush1.msra.mxu0 0.0
    %298 = vmatprep.subr.mxu0 0.0
    %299 = vmatpush1.msra.mxu0 0.0
    %300 = vmatprep.subr.mxu0 0.0
    %301 = vmatpush1.msra.mxu0 0.0
    %302 = vmatprep.subr.mxu0 0.0
    %303 = vmatpush1.msra.mxu0 0.0
    %304 = vmatprep.subr.mxu0 0.0
    %305 = vmatpush1.msra.mxu0 0.0
    %306 = vmatprep.subr.mxu0 0.0
    %307 = vmatpush1.msra.mxu0 0.0
    %308 = vmatprep.subr.mxu0 0.0
    %309 = vmatpush1.msra.mxu0 0.0
    %310 = vmatprep.mubr.f32.mxu0 0.0
    %311 = vmatmul.mubr.f32.gmra.mrb[0].mxu0 %v241
    %v312 = vpop.f32.mrb[0].mxu0
    %v313 = vadd.f32 %v237, %v312
    %v314 = vpop.f32.mrb[0].mxu0
    %315 = vmatprep.mubr.f32.mxu0 0.0
    %316 = vmatmul.mubr.f32.gmra.mrb[0].mxu0 %v244
    %v317 = vpop.f32.mrb[0].mxu0
    %v318 = vadd.f32 %v237, %v317
    %v319 = vpop.f32.mrb[0].mxu0
    %320 = vdwg.mxu0
    %v321 = vmax.f32 %v313, 0.0
    %v322 = vmax.f32 %v318, 0.0
    %v324 = vlaneseq
    %v325 = vshrl.u32 %v324, 7
    %v326 = vsub.s32 0, %v325
    %v327 = vrot.slane %v138, %v326
    %v330 = vsel %vm239, %v321, 0
    %v333 = vsel %vm239, %v322, 0
    %335 = vmatprep.subr.mxu0 0.0
    %336 = vmatpush1.msra.mxu0 %v134
    %337 = vmatprep.subr.mxu0 0.0
    %338 = vmatpush1.msra.mxu0 %v135
    %339 = vmatprep.subr.mxu0 0.0
    %340 = vmatpush1.msra.mxu0 %v136
    %341 = vmatprep.subr.mxu0 0.0
    %342 = vmatpush1.msra.mxu0 %v137
    %343 = vmatprep.subr.mxu0 0.0
    %344 = vmatpush1.msra.mxu0 0.0
    %345 = vmatprep.subr.mxu0 0.0
    %346 = vmatpush1.msra.mxu0 0.0
    %347 = vmatprep.subr.mxu0 0.0
    %348 = vmatpush1.msra.mxu0 0.0
    %349 = vmatprep.subr.mxu0 0.0
    %350 = vmatpush1.msra.mxu0 0.0
    %351 = vmatprep.subr.mxu0 0.0
    %352 = vmatpush1.msra.mxu0 0.0
    %353 = vmatprep.subr.mxu0 0.0
    %354 = vmatpush1.msra.mxu0 0.0
    %355 = vmatprep.subr.mxu0 0.0
    %356 = vmatpush1.msra.mxu0 0.0
    %357 = vmatprep.subr.mxu0 0.0
    %358 = vmatpush1.msra.mxu0 0.0
    %359 = vmatprep.subr.mxu0 0.0
    %360 = vmatpush1.msra.mxu0 0.0
    %361 = vmatprep.subr.mxu0 0.0
    %362 = vmatpush1.msra.mxu0 0.0
    %363 = vmatprep.subr.mxu0 0.0
    %364 = vmatpush1.msra.mxu0 0.0
    %365 = vmatprep.subr.mxu0 0.0
    %366 = vmatpush1.msra.mxu0 0.0
    %367 = vmatprep.subr.mxu0 0.0
    %368 = vmatpush1.msra.mxu0 0.0
    %369 = vmatprep.subr.mxu0 0.0
    %370 = vmatpush1.msra.mxu0 0.0
    %371 = vmatprep.subr.mxu0 0.0
    %372 = vmatpush1.msra.mxu0 0.0
    %373 = vmatprep.subr.mxu0 0.0
    %374 = vmatpush1.msra.mxu0 0.0
    %375 = vmatprep.subr.mxu0 0.0
    %376 = vmatpush1.msra.mxu0 0.0
    %377 = vmatprep.subr.mxu0 0.0
    %378 = vmatpush1.msra.mxu0 0.0
    %379 = vmatprep.subr.mxu0 0.0
    %380 = vmatpush1.msra.mxu0 0.0
    %381 = vmatprep.subr.mxu0 0.0
    %382 = vmatpush1.msra.mxu0 0.0
    %383 = vmatprep.subr.mxu0 0.0
    %384 = vmatpush1.msra.mxu0 0.0
    %385 = vmatprep.subr.mxu0 0.0
    %386 = vmatpush1.msra.mxu0 0.0
    %387 = vmatprep.subr.mxu0 0.0
    %388 = vmatpush1.msra.mxu0 0.0
    %389 = vmatprep.subr.mxu0 0.0
    %390 = vmatpush1.msra.mxu0 0.0
    %391 = vmatprep.subr.mxu0 0.0
    %392 = vmatpush1.msra.mxu0 0.0
    %393 = vmatprep.subr.mxu0 0.0
    %394 = vmatpush1.msra.mxu0 0.0
    %395 = vmatprep.subr.mxu0 0.0
    %396 = vmatpush1.msra.mxu0 0.0
    %397 = vmatprep.subr.mxu0 0.0
    %398 = vmatpush1.msra.mxu0 0.0
    %399 = vmatprep.mubr.f32.mxu0 0.0
    %400 = vmatmul.mubr.f32.gmra.mrb[0].mxu0 %v330
    %v401 = vpop.f32.mrb[0].mxu0
    %v402 = vadd.f32 %v327, %v401
    %v403 = vpop.f32.mrb[0].mxu0
    %404 = vmatprep.mubr.f32.mxu0 0.0
    %405 = vmatmul.mubr.f32.gmra.mrb[0].mxu0 %v333
    %v406 = vpop.f32.mrb[0].mxu0
    %v407 = vadd.f32 %v327, %v406
    %v408 = vpop.f32.mrb[0].mxu0
    %409 = vdwg.mxu0
    %v410 = vld [vmem:[#allocation6] sm:$0xf]
    %v411 = vld [vmem:[%s8] sm:$0x1]
    %v412 = vld [vmem:[%s9] sm:$0xff]
    %v413 = vld [vmem:[%s9 + $0x8] sm:$0xff]
    %v414 = vld [vmem:[%s9 + $0x10] sm:$0xff]
    %v415 = vld [vmem:[%s9 + $0x18] sm:$0xff]
    %v416 = vld [vmem:[#allocation7] sm:$0x1]
    %v417 = vld [vmem:[#allocation9] sm:$0xff]
    %v418 = vld [vmem:[#allocation9 + $0x8] sm:$0xff]
    %v419 = vld [vmem:[#allocation9 + $0x10] sm:$0xff]
    %v420 = vld [vmem:[#allocation9 + $0x18] sm:$0xff]
    %v421 = vld [vmem:[#allocation10] sm:$0x1]
    %v423 = vlaneseq
    %v424 = vshrl.u32 %v423, 7
    %v425 = vsub.s32 0, %v424
    %v426 = vrot.slane %v411, %v425
    %v429 = vsel %vm152, %v410, 0
    %431 = vmatprep.subr.mxu0 0.0
    %432 = vmatpush1.msra.mxu0 %v429
    %433 = vmatprep.subr.mxu0 0.0
    %434 = vmatpush1.msra.mxu0 0.0
    %435 = vmatprep.subr.mxu0 0.0
    %436 = vmatpush1.msra.mxu0 0.0
    %437 = vmatprep.subr.mxu0 0.0
    %438 = vmatpush1.msra.mxu0 0.0
    %439 = vmatprep.subr.mxu0 0.0
    %440 = vmatpush1.msra.mxu0 0.0
    %441 = vmatprep.subr.mxu0 0.0
    %442 = vmatpush1.msra.mxu0 0.0
    %443 = vmatprep.subr.mxu0 0.0
    %444 = vmatpush1.msra.mxu0 0.0
    %445 = vmatprep.subr.mxu0 0.0
    %446 = vmatpush1.msra.mxu0 0.0
    %447 = vmatprep.subr.mxu0 0.0
    %448 = vmatpush1.msra.mxu0 0.0
    %449 = vmatprep.subr.mxu0 0.0
    %450 = vmatpush1.msra.mxu0 0.0
    %451 = vmatprep.subr.mxu0 0.0
    %452 = vmatpush1.msra.mxu0 0.0
    %453 = vmatprep.subr.mxu0 0.0
    %454 = vmatpush1.msra.mxu0 0.0
    %455 = vmatprep.subr.mxu0 0.0
    %456 = vmatpush1.msra.mxu0 0.0
    %457 = vmatprep.subr.mxu0 0.0
    %458 = vmatpush1.msra.mxu0 0.0
    %459 = vmatprep.subr.mxu0 0.0
    %460 = vmatpush1.msra.mxu0 0.0
    %461 = vmatprep.subr.mxu0 0.0
    %462 = vmatpush1.msra.mxu0 0.0
    %463 = vmatprep.subr.mxu0 0.0
    %464 = vmatpush1.msra.mxu0 0.0
    %465 = vmatprep.subr.mxu0 0.0
    %466 = vmatpush1.msra.mxu0 0.0
    %467 = vmatprep.subr.mxu0 0.0
    %468 = vmatpush1.msra.mxu0 0.0
    %469 = vmatprep.subr.mxu0 0.0
    %470 = vmatpush1.msra.mxu0 0.0
    %471 = vmatprep.subr.mxu0 0.0
    %472 = vmatpush1.msra.mxu0 0.0
    %473 = vmatprep.subr.mxu0 0.0
    %474 = vmatpush1.msra.mxu0 0.0
    %475 = vmatprep.subr.mxu0 0.0
    %476 = vmatpush1.msra.mxu0 0.0
    %477 = vmatprep.subr.mxu0 0.0
    %478 = vmatpush1.msra.mxu0 0.0
    %479 = vmatprep.subr.mxu0 0.0
    %480 = vmatpush1.msra.mxu0 0.0
    %481 = vmatprep.subr.mxu0 0.0
    %482 = vmatpush1.msra.mxu0 0.0
    %483 = vmatprep.subr.mxu0 0.0
    %484 = vmatpush1.msra.mxu0 0.0
    %485 = vmatprep.subr.mxu0 0.0
    %486 = vmatpush1.msra.mxu0 0.0
    %487 = vmatprep.subr.mxu0 0.0
    %488 = vmatpush1.msra.mxu0 0.0
    %489 = vmatprep.subr.mxu0 0.0
    %490 = vmatpush1.msra.mxu0 0.0
    %491 = vmatprep.subr.mxu0 0.0
    %492 = vmatpush1.msra.mxu0 0.0
    %493 = vmatprep.subr.mxu0 0.0
    %494 = vmatpush1.msra.mxu0 0.0
    %495 = vmatprep.mubr.f32.mxu0 0.0
    %496 = vmatmul.mubr.f32.gmra.mrb[0].mxu0 %v147
    %v497 = vpop.f32.mrb[0].mxu0
    %v498 = vadd.f32 %v426, %v497
    %v499 = vpop.f32.mrb[0].mxu0
    %500 = vmatprep.mubr.f32.mxu0 0.0
    %501 = vmatmul.mubr.f32.gmra.mrb[0].mxu0 %v150
    %v502 = vpop.f32.mrb[0].mxu0
    %v503 = vadd.f32 %v426, %v502
    %v504 = vpop.f32.mrb[0].mxu0
    %505 = vdwg.mxu0
    %v506 = vmax.f32 %v498, 0.0
    %v507 = vmax.f32 %v503, 0.0
    %v509 = vlaneseq
    %v510 = vshrl.u32 %v509, 7
    %v511 = vsub.s32 0, %v510
    %v512 = vrot.slane %v416, %v511
    %v515 = vsel %vm239, %v506, 0
    %v518 = vsel %vm239, %v507, 0
    %520 = vmatprep.subr.mxu0 0.0
    %521 = vmatpush1.msra.mxu0 %v412
    %522 = vmatprep.subr.mxu0 0.0
    %523 = vmatpush1.msra.mxu0 %v413
    %524 = vmatprep.subr.mxu0 0.0
    %525 = vmatpush1.msra.mxu0 %v414
    %526 = vmatprep.subr.mxu0 0.0
    %527 = vmatpush1.msra.mxu0 %v415
    %528 = vmatprep.subr.mxu0 0.0
    %529 = vmatpush1.msra.mxu0 0.0
    %530 = vmatprep.subr.mxu0 0.0
    %531 = vmatpush1.msra.mxu0 0.0
    %532 = vmatprep.subr.mxu0 0.0
    %533 = vmatpush1.msra.mxu0 0.0
    %534 = vmatprep.subr.mxu0 0.0
    %535 = vmatpush1.msra.mxu0 0.0
    %536 = vmatprep.subr.mxu0 0.0
    %537 = vmatpush1.msra.mxu0 0.0
    %538 = vmatprep.subr.mxu0 0.0
    %539 = vmatpush1.msra.mxu0 0.0
    %540 = vmatprep.subr.mxu0 0.0
    %541 = vmatpush1.msra.mxu0 0.0
    %542 = vmatprep.subr.mxu0 0.0
    %543 = vmatpush1.msra.mxu0 0.0
    %544 = vmatprep.subr.mxu0 0.0
    %545 = vmatpush1.msra.mxu0 0.0
    %546 = vmatprep.subr.mxu0 0.0
    %547 = vmatpush1.msra.mxu0 0.0
    %548 = vmatprep.subr.mxu0 0.0
    %549 = vmatpush1.msra.mxu0 0.0
    %550 = vmatprep.subr.mxu0 0.0
    %551 = vmatpush1.msra.mxu0 0.0
    %552 = vmatprep.subr.mxu0 0.0
    %553 = vmatpush1.msra.mxu0 0.0
    %554 = vmatprep.subr.mxu0 0.0
    %555 = vmatpush1.msra.mxu0 0.0
    %556 = vmatprep.subr.mxu0 0.0
    %557 = vmatpush1.msra.mxu0 0.0
    %558 = vmatprep.subr.mxu0 0.0
    %559 = vmatpush1.msra.mxu0 0.0
    %560 = vmatprep.subr.mxu0 0.0
    %561 = vmatpush1.msra.mxu0 0.0
    %562 = vmatprep.subr.mxu0 0.0
    %563 = vmatpush1.msra.mxu0 0.0
    %564 = vmatprep.subr.mxu0 0.0
    %565 = vmatpush1.msra.mxu0 0.0
    %566 = vmatprep.subr.mxu0 0.0
    %567 = vmatpush1.msra.mxu0 0.0
    %568 = vmatprep.subr.mxu0 0.0
    %569 = vmatpush1.msra.mxu0 0.0
    %570 = vmatprep.subr.mxu0 0.0
    %571 = vmatpush1.msra.mxu0 0.0
    %572 = vmatprep.subr.mxu0 0.0
    %573 = vmatpush1.msra.mxu0 0.0
    %574 = vmatprep.subr.mxu0 0.0
    %575 = vmatpush1.msra.mxu0 0.0
    %576 = vmatprep.subr.mxu0 0.0
    %577 = vmatpush1.msra.mxu0 0.0
    %578 = vmatprep.subr.mxu0 0.0
    %579 = vmatpush1.msra.mxu0 0.0
    %580 = vmatprep.subr.mxu0 0.0
    %581 = vmatpush1.msra.mxu0 0.0
    %582 = vmatprep.subr.mxu0 0.0
    %583 = vmatpush1.msra.mxu0 0.0
    %584 = vmatprep.mubr.f32.mxu0 0.0
    %585 = vmatmul.mubr.f32.gmra.mrb[0].mxu0 %v515
    %v586 = vpop.f32.mrb[0].mxu0
    %v587 = vadd.f32 %v512, %v586
    %v588 = vpop.f32.mrb[0].mxu0
    %589 = vmatprep.mubr.f32.mxu0 0.0
    %590 = vmatmul.mubr.f32.gmra.mrb[0].mxu0 %v518
    %v591 = vpop.f32.mrb[0].mxu0
    %v592 = vadd.f32 %v512, %v591
    %v593 = vpop.f32.mrb[0].mxu0
    %594 = vdwg.mxu0
    %v595 = vmax.f32 %v587, 0.0
    %v596 = vmax.f32 %v592, 0.0
    %v598 = vlaneseq
    %v599 = vshrl.u32 %v598, 7
    %v600 = vsub.s32 0, %v599
    %v601 = vrot.slane %v421, %v600
    %v604 = vsel %vm239, %v595, 0
    %v607 = vsel %vm239, %v596, 0
    %609 = vmatprep.subr.mxu0 0.0
    %610 = vmatpush1.msra.mxu0 %v417
    %611 = vmatprep.subr.mxu0 0.0
    %612 = vmatpush1.msra.mxu0 %v418
    %613 = vmatprep.subr.mxu0 0.0
    %614 = vmatpush1.msra.mxu0 %v419
    %615 = vmatprep.subr.mxu0 0.0
    %616 = vmatpush1.msra.mxu0 %v420
    %617 = vmatprep.subr.mxu0 0.0
    %618 = vmatpush1.msra.mxu0 0.0
    %619 = vmatprep.subr.mxu0 0.0
    %620 = vmatpush1.msra.mxu0 0.0
    %621 = vmatprep.subr.mxu0 0.0
    %622 = vmatpush1.msra.mxu0 0.0
    %623 = vmatprep.subr.mxu0 0.0
    %624 = vmatpush1.msra.mxu0 0.0
    %625 = vmatprep.subr.mxu0 0.0
    %626 = vmatpush1.msra.mxu0 0.0
    %627 = vmatprep.subr.mxu0 0.0
    %628 = vmatpush1.msra.mxu0 0.0
    %629 = vmatprep.subr.mxu0 0.0
    %630 = vmatpush1.msra.mxu0 0.0
    %631 = vmatprep.subr.mxu0 0.0
    %632 = vmatpush1.msra.mxu0 0.0
    %633 = vmatprep.subr.mxu0 0.0
    %634 = vmatpush1.msra.mxu0 0.0
    %635 = vmatprep.subr.mxu0 0.0
    %636 = vmatpush1.msra.mxu0 0.0
    %637 = vmatprep.subr.mxu0 0.0
    %638 = vmatpush1.msra.mxu0 0.0
    %639 = vmatprep.subr.mxu0 0.0
    %640 = vmatpush1.msra.mxu0 0.0
    %641 = vmatprep.subr.mxu0 0.0
    %642 = vmatpush1.msra.mxu0 0.0
    %643 = vmatprep.subr.mxu0 0.0
    %644 = vmatpush1.msra.mxu0 0.0
    %645 = vmatprep.subr.mxu0 0.0
    %646 = vmatpush1.msra.mxu0 0.0
    %647 = vmatprep.subr.mxu0 0.0
    %648 = vmatpush1.msra.mxu0 0.0
    %649 = vmatprep.subr.mxu0 0.0
    %650 = vmatpush1.msra.mxu0 0.0
    %651 = vmatprep.subr.mxu0 0.0
    %652 = vmatpush1.msra.mxu0 0.0
    %653 = vmatprep.subr.mxu0 0.0
    %654 = vmatpush1.msra.mxu0 0.0
    %655 = vmatprep.subr.mxu0 0.0
    %656 = vmatpush1.msra.mxu0 0.0
    %657 = vmatprep.subr.mxu0 0.0
    %658 = vmatpush1.msra.mxu0 0.0
    %659 = vmatprep.subr.mxu0 0.0
    %660 = vmatpush1.msra.mxu0 0.0
    %661 = vmatprep.subr.mxu0 0.0
    %662 = vmatpush1.msra.mxu0 0.0
    %663 = vmatprep.subr.mxu0 0.0
    %664 = vmatpush1.msra.mxu0 0.0
    %665 = vmatprep.subr.mxu0 0.0
    %666 = vmatpush1.msra.mxu0 0.0
    %667 = vmatprep.subr.mxu0 0.0
    %668 = vmatpush1.msra.mxu0 0.0
    %669 = vmatprep.subr.mxu0 0.0
    %670 = vmatpush1.msra.mxu0 0.0
    %671 = vmatprep.subr.mxu0 0.0
    %672 = vmatpush1.msra.mxu0 0.0
    %673 = vmatprep.mubr.f32.mxu0 0.0
    %674 = vmatmul.mubr.f32.gmra.mrb[0].mxu0 %v604
    %v675 = vpop.f32.mrb[0].mxu0
    %v676 = vadd.f32 %v601, %v675
    %v677 = vpop.f32.mrb[0].mxu0
    %678 = vmatprep.mubr.f32.mxu0 0.0
    %679 = vmatmul.mubr.f32.gmra.mrb[0].mxu0 %v607
    %v680 = vpop.f32.mrb[0].mxu0
    %v681 = vadd.f32 %v601, %v680
    %v682 = vpop.f32.mrb[0].mxu0
    %683 = vdwg.mxu0
    %v684 = vld [vmem:[%s13] sm:$0xff]
    %v685 = vld [vmem:[%s13 + $0x8] sm:$0xff]
    %v686 = vld [vmem:[%s13 + $0x10] sm:$0xff]
    %v687 = vld [vmem:[%s13 + $0x18] sm:$0xff]
    %688 = vxpose.xlu0.b32.start [1/16] %v402, 128
    %689 = vxpose.xlu0.b32.cont [2/16] %v407, 128
    %690 = vxpose.xlu0.b32.cont [3/16] 0.0, 128
    %691 = vxpose.xlu0.b32.cont [4/16] 0.0, 128
    %692 = vxpose.xlu0.b32.cont [5/16] 0.0, 128
    %693 = vxpose.xlu0.b32.cont [6/16] 0.0, 128
    %694 = vxpose.xlu0.b32.cont [7/16] 0.0, 128
    %695 = vxpose.xlu0.b32.cont [8/16] 0.0, 128
    %696 = vxpose.xlu0.b32.cont [9/16] 0.0, 128
    %697 = vxpose.xlu0.b32.cont [10/16] 0.0, 128
    %698 = vxpose.xlu0.b32.cont [11/16] 0.0, 128
    %699 = vxpose.xlu0.b32.cont [12/16] 0.0, 128
    %700 = vxpose.xlu0.b32.cont [13/16] 0.0, 128
    %701 = vxpose.xlu0.b32.cont [14/16] 0.0, 128
    %702 = vxpose.xlu0.b32.cont [15/16] 0.0, 128
    %703 = vxpose.xlu0.b32.end [16/16] 0.0, 128
    %v704 = vpop.trf.xlu0
    %v705 = vpop.trf.xlu0
    %v706 = vpop.trf.xlu0
    %v707 = vpop.trf.xlu0
    %v708 = vpop.trf.xlu0
    %v709 = vpop.trf.xlu0
    %v710 = vpop.trf.xlu0
    %v711 = vpop.trf.xlu0
    %v712 = vpop.trf.xlu0
    %v713 = vpop.trf.xlu0
    %v714 = vpop.trf.xlu0
    %v715 = vpop.trf.xlu0
    %v716 = vpop.trf.xlu0
    %v717 = vpop.trf.xlu0
    %v718 = vpop.trf.xlu0
    %v719 = vpop.trf.xlu0
    %vm720 = vcmask 130048
    %v722 = vsel %vm720, %v704, 0
    %v725 = vsel %vm720, %v705, 0
    %v728 = vsel %vm720, %v706, 0
    %v731 = vsel %vm720, %v707, 0
    %733 = vmatprep.subr.mxu0 0.0
    %734 = vmatpush1.msra.mxu0 %v676
    %735 = vmatprep.subr.mxu0 0.0
    %736 = vmatpush1.msra.mxu0 %v681
    %737 = vmatprep.subr.mxu0 0.0
    %738 = vmatpush1.msra.mxu0 0.0
    %739 = vmatprep.subr.mxu0 0.0
    %740 = vmatpush1.msra.mxu0 0.0
    %741 = vmatprep.subr.mxu0 0.0
    %742 = vmatpush1.msra.mxu0 0.0
    %743 = vmatprep.subr.mxu0 0.0
    %744 = vmatpush1.msra.mxu0 0.0
    %745 = vmatprep.subr.mxu0 0.0
    %746 = vmatpush1.msra.mxu0 0.0
    %747 = vmatprep.subr.mxu0 0.0
    %748 = vmatpush1.msra.mxu0 0.0
    %749 = vmatprep.subr.mxu0 0.0
    %750 = vmatpush1.msra.mxu0 0.0
    %751 = vmatprep.subr.mxu0 0.0
    %752 = vmatpush1.msra.mxu0 0.0
    %753 = vmatprep.subr.mxu0 0.0
    %754 = vmatpush1.msra.mxu0 0.0
    %755 = vmatprep.subr.mxu0 0.0
    %756 = vmatpush1.msra.mxu0 0.0
    %757 = vmatprep.subr.mxu0 0.0
    %758 = vmatpush1.msra.mxu0 0.0
    %759 = vmatprep.subr.mxu0 0.0
    %760 = vmatpush1.msra.mxu0 0.0
    %761 = vmatprep.subr.mxu0 0.0
    %762 = vmatpush1.msra.mxu0 0.0
    %763 = vmatprep.subr.mxu0 0.0
    %764 = vmatpush1.msra.mxu0 0.0
    %765 = vmatprep.subr.mxu0 0.0
    %766 = vmatpush1.msra.mxu0 0.0
    %767 = vmatprep.subr.mxu0 0.0
    %768 = vmatpush1.msra.mxu0 0.0
    %769 = vmatprep.subr.mxu0 0.0
    %770 = vmatpush1.msra.mxu0 0.0
    %771 = vmatprep.subr.mxu0 0.0
    %772 = vmatpush1.msra.mxu0 0.0
    %773 = vmatprep.subr.mxu0 0.0
    %774 = vmatpush1.msra.mxu0 0.0
    %775 = vmatprep.subr.mxu0 0.0
    %776 = vmatpush1.msra.mxu0 0.0
    %777 = vmatprep.subr.mxu0 0.0
    %778 = vmatpush1.msra.mxu0 0.0
    %779 = vmatprep.subr.mxu0 0.0
    %780 = vmatpush1.msra.mxu0 0.0
    %781 = vmatprep.subr.mxu0 0.0
    %782 = vmatpush1.msra.mxu0 0.0
    %783 = vmatprep.subr.mxu0 0.0
    %784 = vmatpush1.msra.mxu0 0.0
    %785 = vmatprep.subr.mxu0 0.0
    %786 = vmatpush1.msra.mxu0 0.0
    %787 = vmatprep.subr.mxu0 0.0
    %788 = vmatpush1.msra.mxu0 0.0
    %789 = vmatprep.subr.mxu0 0.0
    %790 = vmatpush1.msra.mxu0 0.0
    %791 = vmatprep.subr.mxu0 0.0
    %792 = vmatpush1.msra.mxu0 0.0
    %793 = vmatprep.subr.mxu0 0.0
    %794 = vmatpush1.msra.mxu0 0.0
    %795 = vmatprep.subr.mxu0 0.0
    %796 = vmatpush1.msra.mxu0 0.0
    %797 = vmatprep.mubr.f32.mxu0 0.0
    %798 = vmatmul.mubr.f32.gmra.mrb[0].mxu0 %v722
    %v799 = vpop.f32.mrb[0].mxu0
    %v800 = vadd.f32 0.0, %v799
    %v801 = vpop.f32.mrb[0].mxu0
    %802 = vmatprep.mubr.f32.mxu0 0.0
    %803 = vmatmul.mubr.f32.gmra.mrb[0].mxu0 %v725
    %v804 = vpop.f32.mrb[0].mxu0
    %v805 = vadd.f32 0.0, %v804
    %v806 = vpop.f32.mrb[0].mxu0
    %807 = vmatprep.mubr.f32.mxu0 0.0
    %808 = vmatmul.mubr.f32.gmra.mrb[0].mxu0 %v728
    %v809 = vpop.f32.mrb[0].mxu0
    %v810 = vadd.f32 0.0, %v809
    %v811 = vpop.f32.mrb[0].mxu0
    %812 = vmatprep.mubr.f32.mxu0 0.0
    %813 = vmatmul.mubr.f32.gmra.mrb[0].mxu0 %v731
    %v814 = vpop.f32.mrb[0].mxu0
    %v815 = vadd.f32 0.0, %v814
    %v816 = vpop.f32.mrb[0].mxu0
    %817 = vdwg.mxu0
    %v818 = vadd.f32 %v684, %v800
    %v819 = vadd.f32 %v685, %v805
    %v820 = vadd.f32 %v686, %v810
    %v821 = vadd.f32 %v687, %v815
    %822 = vst.msk [vmem:[%s13] sm:$0xff] %vm239, %v818
    %823 = vst.msk [vmem:[%s13 + $0x8] sm:$0xff] %vm239, %v819
    %824 = vst.msk [vmem:[%s13 + $0x10] sm:$0xff] %vm239, %v820
    %825 = vst.msk [vmem:[%s13 + $0x18] sm:$0xff] %vm239, %v821
    // Predicated region
    $region82: #{mlp_forward.2} parent=1 // pred_check
      _
    $region83: #{mlp_forward.2} parent=1 // pred_check_branch
      %827 = sbr.rel (0) target = $region85
    $region84: #{mlp_forward.2} parent=1 // pred_region
      _
    $region85: #{mlp_forward.2} parent=1 // pred_fallthru
      _
    // Predicated region
    $region86: #{mlp_forward.2} parent=1 // pred_check
      _
    $region87: #{mlp_forward.2} parent=1 // pred_check_branch
      %829 = sbr.rel (0) target = $region89
    $region88: #{mlp_forward.2} parent=1 // pred_region
      _
    $region89: #{mlp_forward.2} parent=1 // pred_fallthru
      _
    %830 = vsyncpa [#allocation3], 1
    %831 = vsyncpa [#allocation5], 1
    %832 = vsyncpa [#allocation8], 1
    %833 = vsyncpa [#allocation11], 1

// kernel: mlp_forward.3
$region0: #{mlp_forward.3}
  #allocation0 [shape = 'u32[]', space=smem, size = 0x4, offset = 0x4, fixed_abs, tag = 'smem constant byte address 0x4 - core index']
  #allocation1 [shape = 'u32[144,128]{1,0:T(1,128)}', space=vmem, size = 0x12000, scoped, tag = 'internal scratch']
  %s0 = inlined_call_operand.vmem [shape: f32[32,32], index: 0, kind: input, shape index: {}]
  %s1 = inlined_call_operand.vmem [shape: f32[16,4], index: 1, kind: input, shape index: {}]
  %s2 = inlined_call_operand.vmem [shape: f32[4,32], index: 2, kind: input, shape index: {}]
  %s3 = inlined_call_operand.vmem [shape: f32[1,32], index: 3, kind: input, shape index: {}]
  %s4 = inlined_call_operand.vmem [shape: f32[32,32], index: 4, kind: input, shape index: {}]
  %s5 = inlined_call_operand.vmem [shape: f32[1,32], index: 5, kind: input, shape index: {}]
  %s6 = inlined_call_operand.vmem [shape: f32[32,32], index: 6, kind: input, shape index: {}]
  %s7 = inlined_call_operand.vmem [shape: f32[1,32], index: 7, kind: input, shape index: {}]
  %s8 = inlined_call_operand.vmem [shape: f32[32,32], index: 8, kind: input, shape index: {}]
  %s9 = inlined_call_operand.vmem [shape: f32[1,32], index: 9, kind: input, shape index: {}]
  %s10 = inlined_call_operand.vmem [shape: f32[32,4], index: 10, kind: input, shape index: {}]
  %s11 = inlined_call_operand.vmem [shape: f32[1,4], index: 11, kind: input, shape index: {}]
  %s12 = inlined_call_operand.vmem [shape: f32[16,4], index: 12, kind: output, shape index: {}]
  %s13 = sld [smem:[#allocation0]]
  $region58: #{mlp_forward.3} parent=0
    _
  %s15 = ssub.s32 1, %s13
  %s16 = scalar_select 0, %s15, %s13
  // Predicated region
  $region2: #{mlp_forward.3} parent=0 // pred_check
    _
  $region3: #{mlp_forward.3} parent=0 // pred_check_branch
    %18 = sbr.rel (0) target = $region5
  $region4: #{mlp_forward.3} parent=0 // pred_region
    _
  $region5: #{mlp_forward.3} parent=0 // pred_fallthru
    _
  // Predicated region
  $region6: #{mlp_forward.3} parent=0 // pred_check
    _
  $region7: #{mlp_forward.3} parent=0 // pred_check_branch
    %20 = sbr.rel (0) target = $region9
  $region8: #{mlp_forward.3} parent=0 // pred_region
    _
  $region9: #{mlp_forward.3} parent=0 // pred_fallthru
    _
  // Predicated region
  $region10: #{mlp_forward.3} parent=0 // pred_check
    _
  $region11: #{mlp_forward.3} parent=0 // pred_check_branch
    %22 = sbr.rel (0) target = $region13
  $region12: #{mlp_forward.3} parent=0 // pred_region
    _
  $region13: #{mlp_forward.3} parent=0 // pred_fallthru
    _
  // Predicated region
  $region14: #{mlp_forward.3} parent=0 // pred_check
    _
  $region15: #{mlp_forward.3} parent=0 // pred_check_branch
    %24 = sbr.rel (0) target = $region17
  $region16: #{mlp_forward.3} parent=0 // pred_region
    _
  $region17: #{mlp_forward.3} parent=0 // pred_fallthru
    _
  // Predicated region
  $region18: #{mlp_forward.3} parent=0 // pred_check
    _
  $region19: #{mlp_forward.3} parent=0 // pred_check_branch
    %26 = sbr.rel (0) target = $region21
  $region20: #{mlp_forward.3} parent=0 // pred_region
    _
  $region21: #{mlp_forward.3} parent=0 // pred_fallthru
    _
  // Predicated region
  $region22: #{mlp_forward.3} parent=0 // pred_check
    _
  $region23: #{mlp_forward.3} parent=0 // pred_check_branch
    %28 = sbr.rel (0) target = $region25
  $region24: #{mlp_forward.3} parent=0 // pred_region
    _
  $region25: #{mlp_forward.3} parent=0 // pred_fallthru
    _
  // Predicated region
  $region26: #{mlp_forward.3} parent=0 // pred_check
    _
  $region27: #{mlp_forward.3} parent=0 // pred_check_branch
    %30 = sbr.rel (0) target = $region29
  $region28: #{mlp_forward.3} parent=0 // pred_region
    _
  $region29: #{mlp_forward.3} parent=0 // pred_fallthru
    _
  // Predicated region
  $region30: #{mlp_forward.3} parent=0 // pred_check
    _
  $region31: #{mlp_forward.3} parent=0 // pred_check_branch
    %32 = sbr.rel (0) target = $region33
  $region32: #{mlp_forward.3} parent=0 // pred_region
    _
  $region33: #{mlp_forward.3} parent=0 // pred_fallthru
    _
  // Predicated region
  $region34: #{mlp_forward.3} parent=0 // pred_check
    _
  $region35: #{mlp_forward.3} parent=0 // pred_check_branch
    %34 = sbr.rel (0) target = $region37
  $region36: #{mlp_forward.3} parent=0 // pred_region
    _
  $region37: #{mlp_forward.3} parent=0 // pred_fallthru
    _
  // Predicated region
  $region38: #{mlp_forward.3} parent=0 // pred_check
    _
  $region39: #{mlp_forward.3} parent=0 // pred_check_branch
    %36 = sbr.rel (0) target = $region41
  $region40: #{mlp_forward.3} parent=0 // pred_region
    _
  $region41: #{mlp_forward.3} parent=0 // pred_fallthru
    _
  // Predicated region
  $region42: #{mlp_forward.3} parent=0 // pred_check
    _
  $region43: #{mlp_forward.3} parent=0 // pred_check_branch
    %38 = sbr.rel (0) target = $region45
  $region44: #{mlp_forward.3} parent=0 // pred_region
    _
  $region45: #{mlp_forward.3} parent=0 // pred_fallthru
    _
  // Predicated region
  $region46: #{mlp_forward.3} parent=0 // pred_check
    _
  $region47: #{mlp_forward.3} parent=0 // pred_check_branch
    %40 = sbr.rel (0) target = $region49
  $region48: #{mlp_forward.3} parent=0 // pred_region
    _
  $region49: #{mlp_forward.3} parent=0 // pred_fallthru
    _
  %v41 = vld [vmem:[%s0] sm:$0xff]
  %v42 = vld [vmem:[%s0 + $0x8] sm:$0xff]
  %v43 = vld [vmem:[%s0 + $0x10] sm:$0xff]
  %v44 = vld [vmem:[%s0 + $0x18] sm:$0xff]
  %vm45 = vcmask 261120
  %v46 = vsel %vm45, %v41, -inf
  %47 = vmax.xlane.f32.xlu0 %v46
  %v48 = vpop.xlane.xlu0 %47
  %v49 = vsel %vm45, %v42, -inf
  %50 = vmax.xlane.f32.xlu0 %v49
  %v51 = vpop.xlane.xlu0 %50
  %v52 = vsel %vm45, %v43, -inf
  %53 = vmax.xlane.f32.xlu0 %v52
  %v54 = vpop.xlane.xlu0 %53
  %v55 = vsel %vm45, %v44, -inf
  %56 = vmax.xlane.f32.xlu0 %v55
  %v57 = vpop.xlane.xlu0 %56
  %v58 = vsub.f32 %v41, %v48
  %v59 = vsub.f32 %v42, %v51
  %v60 = vsub.f32 %v43, %v54
  %v61 = vsub.f32 %v44, %v57
  %v62 = vmul.f32 %v58, 1.442695
  %v63 = vpow.pop %v62
  %v64 = vmul.f32 %v59, 1.442695
  %v65 = vpow.pop %v64
  %v66 = vmul.f32 %v60, 1.442695
  %v67 = vpow.pop %v66
  %v68 = vmul.f32 %v61, 1.442695
  %v69 = vpow.pop %v68
  %v70 = vsel %vm45, %v63, 0.0
  %71 = vadd.xlane.f32.xlu0 %v70
  %v72 = vpop.xlane.xlu0 %71
  %v73 = vsel %vm45, %v65, 0.0
  %74 = vadd.xlane.f32.xlu0 %v73
  %v75 = vpop.xlane.xlu0 %74
  %v76 = vsel %vm45, %v67, 0.0
  %77 = vadd.xlane.f32.xlu0 %v76
  %v78 = vpop.xlane.xlu0 %77
  %v79 = vsel %vm45, %v69, 0.0
  %80 = vadd.xlane.f32.xlu0 %v79
  %v81 = vpop.xlane.xlu0 %80
  %v82 = vrcp.pop %v72
  %v83 = vmul.f32 %v63, %v82
  %v84 = vrcp.pop %v75
  %v85 = vmul.f32 %v65, %v84
  %v86 = vrcp.pop %v78
  %v87 = vmul.f32 %v67, %v86
  %v88 = vrcp.pop %v81
  %v89 = vmul.f32 %v69, %v88
  %v90 = vld [vmem:[%s1] sm:$0xff]
  %v91 = vld [vmem:[%s1 + $0x8] sm:$0xff]
  %v92 = vld [vmem:[%s2] sm:$0xf]
  %v93 = vld [vmem:[%s3] sm:$0x1]
  %v94 = vld [vmem:[%s4] sm:$0xff]
  %v95 = vld [vmem:[%s4 + $0x8] sm:$0xff]
  %v96 = vld [vmem:[%s4 + $0x10] sm:$0xff]
  %v97 = vld [vmem:[%s4 + $0x18] sm:$0xff]
  %v98 = vld [vmem:[%s5] sm:$0x1]
  %v99 = vld [vmem:[%s6] sm:$0xff]
  %v100 = vld [vmem:[%s6 + $0x8] sm:$0xff]
  %v101 = vld [vmem:[%s6 + $0x10] sm:$0xff]
  %v102 = vld [vmem:[%s6 + $0x18] sm:$0xff]
  %v103 = vld [vmem:[%s7] sm:$0x1]
  %v105 = vlaneseq
  %v106 = vshrl.u32 %v105, 7
  %v107 = vsub.s32 0, %v106
  %v108 = vrot.slane %v93, %v107
  %vm110 = vcmask 31744
  %v112 = vsel %vm110, %v90, 0
  %v115 = vsel %vm110, %v91, 0
  %vm117 = vcmask 1043456
  %v119 = vsel %vm117, %v92, 0
  %121 = vmatprep.subr.mxu0 0.0
  %122 = vmatpush1.msra.mxu0 %v119
  %123 = vmatprep.subr.mxu0 0.0
  %124 = vmatpush1.msra.mxu0 0.0
  %125 = vmatprep.subr.mxu0 0.0
  %126 = vmatpush1.msra.mxu0 0.0
  %127 = vmatprep.subr.mxu0 0.0
  %128 = vmatpush1.msra.mxu0 0.0
  %129 = vmatprep.subr.mxu0 0.0
  %130 = vmatpush1.msra.mxu0 0.0
  %131 = vmatprep.subr.mxu0 0.0
  %132 = vmatpush1.msra.mxu0 0.0
  %133 = vmatprep.subr.mxu0 0.0
  %134 = vmatpush1.msra.mxu0 0.0
  %135 = vmatprep.subr.mxu0 0.0
  %136 = vmatpush1.msra.mxu0 0.0
  %137 = vmatprep.subr.mxu0 0.0
  %138 = vmatpush1.msra.mxu0 0.0
  %139 = vmatprep.subr.mxu0 0.0
  %140 = vmatpush1.msra.mxu0 0.0
  %141 = vmatprep.subr.mxu0 0.0
  %142 = vmatpush1.msra.mxu0 0.0
  %143 = vmatprep.subr.mxu0 0.0
  %144 = vmatpush1.msra.mxu0 0.0
  %145 = vmatprep.subr.mxu0 0.0
  %146 = vmatpush1.msra.mxu0 0.0
  %147 = vmatprep.subr.mxu0 0.0
  %148 = vmatpush1.msra.mxu0 0.0
  %149 = vmatprep.subr.mxu0 0.0
  %150 = vmatpush1.msra.mxu0 0.0
  %151 = vmatprep.subr.mxu0 0.0
  %152 = vmatpush1.msra.mxu0 0.0
  %153 = vmatprep.subr.mxu0 0.0
  %154 = vmatpush1.msra.mxu0 0.0
  %155 = vmatprep.subr.mxu0 0.0
  %156 = vmatpush1.msra.mxu0 0.0
  %157 = vmatprep.subr.mxu0 0.0
  %158 = vmatpush1.msra.mxu0 0.0
  %159 = vmatprep.subr.mxu0 0.0
  %160 = vmatpush1.msra.mxu0 0.0
  %161 = vmatprep.subr.mxu0 0.0
  %162 = vmatpush1.msra.mxu0 0.0
  %163 = vmatprep.subr.mxu0 0.0
  %164 = vmatpush1.msra.mxu0 0.0
  %165 = vmatprep.subr.mxu0 0.0
  %166 = vmatpush1.msra.mxu0 0.0
  %167 = vmatprep.subr.mxu0 0.0
  %168 = vmatpush1.msra.mxu0 0.0
  %169 = vmatprep.subr.mxu0 0.0
  %170 = vmatpush1.msra.mxu0 0.0
  %171 = vmatprep.subr.mxu0 0.0
  %172 = vmatpush1.msra.mxu0 0.0
  %173 = vmatprep.subr.mxu0 0.0
  %174 = vmatpush1.msra.mxu0 0.0
  %175 = vmatprep.subr.mxu0 0.0
  %176 = vmatpush1.msra.mxu0 0.0
  %177 = vmatprep.subr.mxu0 0.0
  %178 = vmatpush1.msra.mxu0 0.0
  %179 = vmatprep.subr.mxu0 0.0
  %180 = vmatpush1.msra.mxu0 0.0
  %181 = vmatprep.subr.mxu0 0.0
  %182 = vmatpush1.msra.mxu0 0.0
  %183 = vmatprep.subr.mxu0 0.0
  %184 = vmatpush1.msra.mxu0 0.0
  %185 = vmatprep.mubr.f32.mxu0 0.0
  %186 = vmatmul.mubr.f32.gmra.mrb[0].mxu0 %v112
  %v187 = vpop.f32.mrb[0].mxu0
  %v188 = vadd.f32 %v108, %v187
  %v189 = vpop.f32.mrb[0].mxu0
  %190 = vmatprep.mubr.f32.mxu0 0.0
  %191 = vmatmul.mubr.f32.gmra.mrb[0].mxu0 %v115
  %v192 = vpop.f32.mrb[0].mxu0
  %v193 = vadd.f32 %v108, %v192
  %v194 = vpop.f32.mrb[0].mxu0
  %195 = vdwg.mxu0
  %v196 = vmax.f32 %v188, 0.0
  %v197 = vmax.f32 %v193, 0.0
  %v199 = vlaneseq
  %v200 = vshrl.u32 %v199, 7
  %v201 = vsub.s32 0, %v200
  %v202 = vrot.slane %v98, %v201
  %v205 = vsel %vm45, %v196, 0
  %v208 = vsel %vm45, %v197, 0
  %210 = vmatprep.subr.mxu0 0.0
  %211 = vmatpush1.msra.mxu0 %v94
  %212 = vmatprep.subr.mxu0 0.0
  %213 = vmatpush1.msra.mxu0 %v95
  %214 = vmatprep.subr.mxu0 0.0
  %215 = vmatpush1.msra.mxu0 %v96
  %216 = vmatprep.subr.mxu0 0.0
  %217 = vmatpush1.msra.mxu0 %v97
  %218 = vmatprep.subr.mxu0 0.0
  %219 = vmatpush1.msra.mxu0 0.0
  %220 = vmatprep.subr.mxu0 0.0
  %221 = vmatpush1.msra.mxu0 0.0
  %222 = vmatprep.subr.mxu0 0.0
  %223 = vmatpush1.msra.mxu0 0.0
  %224 = vmatprep.subr.mxu0 0.0
  %225 = vmatpush1.msra.mxu0 0.0
  %226 = vmatprep.subr.mxu0 0.0
  %227 = vmatpush1.msra.mxu0 0.0
  %228 = vmatprep.subr.mxu0 0.0
  %229 = vmatpush1.msra.mxu0 0.0
  %230 = vmatprep.subr.mxu0 0.0
  %231 = vmatpush1.msra.mxu0 0.0
  %232 = vmatprep.subr.mxu0 0.0
  %233 = vmatpush1.msra.mxu0 0.0
  %234 = vmatprep.subr.mxu0 0.0
  %235 = vmatpush1.msra.mxu0 0.0
  %236 = vmatprep.subr.mxu0 0.0
  %237 = vmatpush1.msra.mxu0 0.0
  %238 = vmatprep.subr.mxu0 0.0
  %239 = vmatpush1.msra.mxu0 0.0
  %240 = vmatprep.subr.mxu0 0.0
  %241 = vmatpush1.msra.mxu0 0.0
  %242 = vmatprep.subr.mxu0 0.0
  %243 = vmatpush1.msra.mxu0 0.0
  %244 = vmatprep.subr.mxu0 0.0
  %245 = vmatpush1.msra.mxu0 0.0
  %246 = vmatprep.subr.mxu0 0.0
  %247 = vmatpush1.msra.mxu0 0.0
  %248 = vmatprep.subr.mxu0 0.0
  %249 = vmatpush1.msra.mxu0 0.0
  %250 = vmatprep.subr.mxu0 0.0
  %251 = vmatpush1.msra.mxu0 0.0
  %252 = vmatprep.subr.mxu0 0.0
  %253 = vmatpush1.msra.mxu0 0.0
  %254 = vmatprep.subr.mxu0 0.0
  %255 = vmatpush1.msra.mxu0 0.0
  %256 = vmatprep.subr.mxu0 0.0
  %257 = vmatpush1.msra.mxu0 0.0
  %258 = vmatprep.subr.mxu0 0.0
  %259 = vmatpush1.msra.mxu0 0.0
  %260 = vmatprep.subr.mxu0 0.0
  %261 = vmatpush1.msra.mxu0 0.0
  %262 = vmatprep.subr.mxu0 0.0
  %263 = vmatpush1.msra.mxu0 0.0
  %264 = vmatprep.subr.mxu0 0.0
  %265 = vmatpush1.msra.mxu0 0.0
  %266 = vmatprep.subr.mxu0 0.0
  %267 = vmatpush1.msra.mxu0 0.0
  %268 = vmatprep.subr.mxu0 0.0
  %269 = vmatpush1.msra.mxu0 0.0
  %270 = vmatprep.subr.mxu0 0.0
  %271 = vmatpush1.msra.mxu0 0.0
  %272 = vmatprep.subr.mxu0 0.0
  %273 = vmatpush1.msra.mxu0 0.0
  %274 = vmatprep.mubr.f32.mxu0 0.0
  %275 = vmatmul.mubr.f32.gmra.mrb[0].mxu0 %v205
  %v276 = vpop.f32.mrb[0].mxu0
  %v277 = vadd.f32 %v202, %v276
  %v278 = vpop.f32.mrb[0].mxu0
  %279 = vmatprep.mubr.f32.mxu0 0.0
  %280 = vmatmul.mubr.f32.gmra.mrb[0].mxu0 %v208
  %v281 = vpop.f32.mrb[0].mxu0
  %v282 = vadd.f32 %v202, %v281
  %v283 = vpop.f32.mrb[0].mxu0
  %284 = vdwg.mxu0
  %v285 = vmax.f32 %v277, 0.0
  %v286 = vmax.f32 %v282, 0.0
  %v288 = vlaneseq
  %v289 = vshrl.u32 %v288, 7
  %v290 = vsub.s32 0, %v289
  %v291 = vrot.slane %v103, %v290
  %v294 = vsel %vm45, %v285, 0
  %v297 = vsel %vm45, %v286, 0
  %299 = vmatprep.subr.mxu0 0.0
  %300 = vmatpush1.msra.mxu0 %v99
  %301 = vmatprep.subr.mxu0 0.0
  %302 = vmatpush1.msra.mxu0 %v100
  %303 = vmatprep.subr.mxu0 0.0
  %304 = vmatpush1.msra.mxu0 %v101
  %305 = vmatprep.subr.mxu0 0.0
  %306 = vmatpush1.msra.mxu0 %v102
  %307 = vmatprep.subr.mxu0 0.0
  %308 = vmatpush1.msra.mxu0 0.0
  %309 = vmatprep.subr.mxu0 0.0
  %310 = vmatpush1.msra.mxu0 0.0
  %311 = vmatprep.subr.mxu0 0.0
  %312 = vmatpush1.msra.mxu0 0.0
  %313 = vmatprep.subr.mxu0 0.0
  %314 = vmatpush1.msra.mxu0 0.0
  %315 = vmatprep.subr.mxu0 0.0
  %316 = vmatpush1.msra.mxu0 0.0
  %317 = vmatprep.subr.mxu0 0.0
  %318 = vmatpush1.msra.mxu0 0.0
  %319 = vmatprep.subr.mxu0 0.0
  %320 = vmatpush1.msra.mxu0 0.0
  %321 = vmatprep.subr.mxu0 0.0
  %322 = vmatpush1.msra.mxu0 0.0
  %323 = vmatprep.subr.mxu0 0.0
  %324 = vmatpush1.msra.mxu0 0.0
  %325 = vmatprep.subr.mxu0 0.0
  %326 = vmatpush1.msra.mxu0 0.0
  %327 = vmatprep.subr.mxu0 0.0
  %328 = vmatpush1.msra.mxu0 0.0
  %329 = vmatprep.subr.mxu0 0.0
  %330 = vmatpush1.msra.mxu0 0.0
  %331 = vmatprep.subr.mxu0 0.0
  %332 = vmatpush1.msra.mxu0 0.0
  %333 = vmatprep.subr.mxu0 0.0
  %334 = vmatpush1.msra.mxu0 0.0
  %335 = vmatprep.subr.mxu0 0.0
  %336 = vmatpush1.msra.mxu0 0.0
  %337 = vmatprep.subr.mxu0 0.0
  %338 = vmatpush1.msra.mxu0 0.0
  %339 = vmatprep.subr.mxu0 0.0
  %340 = vmatpush1.msra.mxu0 0.0
  %341 = vmatprep.subr.mxu0 0.0
  %342 = vmatpush1.msra.mxu0 0.0
  %343 = vmatprep.subr.mxu0 0.0
  %344 = vmatpush1.msra.mxu0 0.0
  %345 = vmatprep.subr.mxu0 0.0
  %346 = vmatpush1.msra.mxu0 0.0
  %347 = vmatprep.subr.mxu0 0.0
  %348 = vmatpush1.msra.mxu0 0.0
  %349 = vmatprep.subr.mxu0 0.0
  %350 = vmatpush1.msra.mxu0 0.0
  %351 = vmatprep.subr.mxu0 0.0
  %352 = vmatpush1.msra.mxu0 0.0
  %353 = vmatprep.subr.mxu0 0.0
  %354 = vmatpush1.msra.mxu0 0.0
  %355 = vmatprep.subr.mxu0 0.0
  %356 = vmatpush1.msra.mxu0 0.0
  %357 = vmatprep.subr.mxu0 0.0
  %358 = vmatpush1.msra.mxu0 0.0
  %359 = vmatprep.subr.mxu0 0.0
  %360 = vmatpush1.msra.mxu0 0.0
  %361 = vmatprep.subr.mxu0 0.0
  %362 = vmatpush1.msra.mxu0 0.0
  %363 = vmatprep.mubr.f32.mxu0 0.0
  %364 = vmatmul.mubr.f32.gmra.mrb[0].mxu0 %v294
  %v365 = vpop.f32.mrb[0].mxu0
  %v366 = vadd.f32 %v291, %v365
  %v367 = vpop.f32.mrb[0].mxu0
  %368 = vmatprep.mubr.f32.mxu0 0.0
  %369 = vmatmul.mubr.f32.gmra.mrb[0].mxu0 %v297
  %v370 = vpop.f32.mrb[0].mxu0
  %v371 = vadd.f32 %v291, %v370
  %v372 = vpop.f32.mrb[0].mxu0
  %373 = vdwg.mxu0
  %v375 = vsel %vm45, %v366, 0
  %v378 = vsel %vm45, %v371, 0
  %v381 = vsel %vm45, %v83, 0
  %v384 = vsel %vm45, %v85, 0
  %v387 = vsel %vm45, %v87, 0
  %v390 = vsel %vm45, %v89, 0
  %392 = vmatprep.subr.mxu0 0.0
  %393 = vmatpush1.xpose.msra.mxu0 %v381
  %394 = vmatprep.subr.mxu0 0.0
  %395 = vmatpush1.xpose.msra.mxu0 %v384
  %396 = vmatprep.subr.mxu0 0.0
  %397 = vmatpush1.xpose.msra.mxu0 %v387
  %398 = vmatprep.subr.mxu0 0.0
  %399 = vmatpush1.xpose.msra.mxu0 %v390
  %400 = vmatprep.subr.mxu0 0.0
  %401 = vmatpush1.xpose.msra.mxu0 0.0
  %402 = vmatprep.subr.mxu0 0.0
  %403 = vmatpush1.xpose.msra.mxu0 0.0
  %404 = vmatprep.subr.mxu0 0.0
  %405 = vmatpush1.xpose.msra.mxu0 0.0
  %406 = vmatprep.subr.mxu0 0.0
  %407 = vmatpush1.xpose.msra.mxu0 0.0
  %408 = vmatprep.subr.mxu0 0.0
  %409 = vmatpush1.xpose.msra.mxu0 0.0
  %410 = vmatprep.subr.mxu0 0.0
  %411 = vmatpush1.xpose.msra.mxu0 0.0
  %412 = vmatprep.subr.mxu0 0.0
  %413 = vmatpush1.xpose.msra.mxu0 0.0
  %414 = vmatprep.subr.mxu0 0.0
  %415 = vmatpush1.xpose.msra.mxu0 0.0
  %416 = vmatprep.subr.mxu0 0.0
  %417 = vmatpush1.xpose.msra.mxu0 0.0
  %418 = vmatprep.subr.mxu0 0.0
  %419 = vmatpush1.xpose.msra.mxu0 0.0
  %420 = vmatprep.subr.mxu0 0.0
  %421 = vmatpush1.xpose.msra.mxu0 0.0
  %422 = vmatprep.subr.mxu0 0.0
  %423 = vmatpush1.xpose.msra.mxu0 0.0
  %424 = vmatprep.subr.mxu0 0.0
  %425 = vmatpush1.xpose.msra.mxu0 0.0
  %426 = vmatprep.subr.mxu0 0.0
  %427 = vmatpush1.xpose.msra.mxu0 0.0
  %428 = vmatprep.subr.mxu0 0.0
  %429 = vmatpush1.xpose.msra.mxu0 0.0
  %430 = vmatprep.subr.mxu0 0.0
  %431 = vmatpush1.xpose.msra.mxu0 0.0
  %432 = vmatprep.subr.mxu0 0.0
  %433 = vmatpush1.xpose.msra.mxu0 0.0
  %434 = vmatprep.subr.mxu0 0.0
  %435 = vmatpush1.xpose.msra.mxu0 0.0
  %436 = vmatprep.subr.mxu0 0.0
  %437 = vmatpush1.xpose.msra.mxu0 0.0
  %438 = vmatprep.subr.mxu0 0.0
  %439 = vmatpush1.xpose.msra.mxu0 0.0
  %440 = vmatprep.subr.mxu0 0.0
  %441 = vmatpush1.xpose.msra.mxu0 0.0
  %442 = vmatprep.subr.mxu0 0.0
  %443 = vmatpush1.xpose.msra.mxu0 0.0
  %444 = vmatprep.subr.mxu0 0.0
  %445 = vmatpush1.xpose.msra.mxu0 0.0
  %446 = vmatprep.subr.mxu0 0.0
  %447 = vmatpush1.xpose.msra.mxu0 0.0
  %448 = vmatprep.subr.mxu0 0.0
  %449 = vmatpush1.xpose.msra.mxu0 0.0
  %450 = vmatprep.subr.mxu0 0.0
  %451 = vmatpush1.xpose.msra.mxu0 0.0
  %452 = vmatprep.subr.mxu0 0.0
  %453 = vmatpush1.xpose.msra.mxu0 0.0
  %454 = vmatprep.subr.mxu0 0.0
  %455 = vmatpush1.xpose.msra.mxu0 0.0
  %456 = vmatprep.mubr.f32.mxu0 0.0
  %457 = vmatmul.mubr.f32.gmra.mrb[0].mxu0 %v375
  %v458 = vpop.f32.mrb[0].mxu0
  %v459 = vadd.f32 0.0, %v458
  %v460 = vpop.f32.mrb[0].mxu0
  %461 = vmatprep.mubr.f32.mxu0 0.0
  %462 = vmatmul.mubr.f32.gmra.mrb[0].mxu0 %v378
  %v463 = vpop.f32.mrb[0].mxu0
  %v464 = vadd.f32 0.0, %v463
  %v465 = vpop.f32.mrb[0].mxu0
  %466 = vdwg.mxu0
  %v467 = vld [vmem:[%s8] sm:$0xff]
  %v468 = vld [vmem:[%s8 + $0x8] sm:$0xff]
  %v469 = vld [vmem:[%s8 + $0x10] sm:$0xff]
  %v470 = vld [vmem:[%s8 + $0x18] sm:$0xff]
  %v471 = vld [vmem:[%s9] sm:$0x1]
  %v473 = vlaneseq
  %v474 = vshrl.u32 %v473, 7
  %v475 = vsub.s32 0, %v474
  %v476 = vrot.slane %v471, %v475
  %v479 = vsel %vm45, %v459, 0
  %v482 = vsel %vm45, %v464, 0
  %484 = vmatprep.subr.mxu0 0.0
  %485 = vmatpush1.msra.mxu0 %v467
  %486 = vmatprep.subr.mxu0 0.0
  %487 = vmatpush1.msra.mxu0 %v468
  %488 = vmatprep.subr.mxu0 0.0
  %489 = vmatpush1.msra.mxu0 %v469
  %490 = vmatprep.subr.mxu0 0.0
  %491 = vmatpush1.msra.mxu0 %v470
  %492 = vmatprep.subr.mxu0 0.0
  %493 = vmatpush1.msra.mxu0 0.0
  %494 = vmatprep.subr.mxu0 0.0
  %495 = vmatpush1.msra.mxu0 0.0
  %496 = vmatprep.subr.mxu0 0.0
  %497 = vmatpush1.msra.mxu0 0.0
  %498 = vmatprep.subr.mxu0 0.0
  %499 = vmatpush1.msra.mxu0 0.0
  %500 = vmatprep.subr.mxu0 0.0
  %501 = vmatpush1.msra.mxu0 0.0
  %502 = vmatprep.subr.mxu0 0.0
  %503 = vmatpush1.msra.mxu0 0.0
  %504 = vmatprep.subr.mxu0 0.0
  %505 = vmatpush1.msra.mxu0 0.0
  %506 = vmatprep.subr.mxu0 0.0
  %507 = vmatpush1.msra.mxu0 0.0
  %508 = vmatprep.subr.mxu0 0.0
  %509 = vmatpush1.msra.mxu0 0.0
  %510 = vmatprep.subr.mxu0 0.0
  %511 = vmatpush1.msra.mxu0 0.0
  %512 = vmatprep.subr.mxu0 0.0
  %513 = vmatpush1.msra.mxu0 0.0
  %514 = vmatprep.subr.mxu0 0.0
  %515 = vmatpush1.msra.mxu0 0.0
  %516 = vmatprep.subr.mxu0 0.0
  %517 = vmatpush1.msra.mxu0 0.0
  %518 = vmatprep.subr.mxu0 0.0
  %519 = vmatpush1.msra.mxu0 0.0
  %520 = vmatprep.subr.mxu0 0.0
  %521 = vmatpush1.msra.mxu0 0.0
  %522 = vmatprep.subr.mxu0 0.0
  %523 = vmatpush1.msra.mxu0 0.0
  %524 = vmatprep.subr.mxu0 0.0
  %525 = vmatpush1.msra.mxu0 0.0
  %526 = vmatprep.subr.mxu0 0.0
  %527 = vmatpush1.msra.mxu0 0.0
  %528 = vmatprep.subr.mxu0 0.0
  %529 = vmatpush1.msra.mxu0 0.0
  %530 = vmatprep.subr.mxu0 0.0
  %531 = vmatpush1.msra.mxu0 0.0
  %532 = vmatprep.subr.mxu0 0.0
  %533 = vmatpush1.msra.mxu0 0.0
  %534 = vmatprep.subr.mxu0 0.0
  %535 = vmatpush1.msra.mxu0 0.0
  %536 = vmatprep.subr.mxu0 0.0
  %537 = vmatpush1.msra.mxu0 0.0
  %538 = vmatprep.subr.mxu0 0.0
  %539 = vmatpush1.msra.mxu0 0.0
  %540 = vmatprep.subr.mxu0 0.0
  %541 = vmatpush1.msra.mxu0 0.0
  %542 = vmatprep.subr.mxu0 0.0
  %543 = vmatpush1.msra.mxu0 0.0
  %544 = vmatprep.subr.mxu0 0.0
  %545 = vmatpush1.msra.mxu0 0.0
  %546 = vmatprep.subr.mxu0 0.0
  %547 = vmatpush1.msra.mxu0 0.0
  %548 = vmatprep.mubr.f32.mxu0 0.0
  %549 = vmatmul.mubr.f32.gmra.mrb[0].mxu0 %v479
  %v550 = vpop.f32.mrb[0].mxu0
  %v551 = vadd.f32 %v476, %v550
  %v552 = vpop.f32.mrb[0].mxu0
  %553 = vmatprep.mubr.f32.mxu0 0.0
  %554 = vmatmul.mubr.f32.gmra.mrb[0].mxu0 %v482
  %v555 = vpop.f32.mrb[0].mxu0
  %v556 = vadd.f32 %v476, %v555
  %v557 = vpop.f32.mrb[0].mxu0
  %558 = vdwg.mxu0
  %v559 = vmax.f32 %v551, 0.0
  %v560 = vmax.f32 %v556, 0.0
  %v561 = vld [vmem:[%s10] sm:$0xff]
  %v562 = vld [vmem:[%s10 + $0x8] sm:$0xff]
  %v563 = vld [vmem:[%s10 + $0x10] sm:$0xff]
  %v564 = vld [vmem:[%s10 + $0x18] sm:$0xff]
  %v565 = vld [vmem:[%s11] sm:$0x1]
  %v567 = vlaneseq
  %v568 = vshrl.u32 %v567, 7
  %v569 = vsub.s32 0, %v568
  %v570 = vrot.slane %v565, %v569
  %v573 = vsel %vm45, %v559, 0
  %v576 = vsel %vm45, %v560, 0
  %578 = vmatprep.subr.mxu0 0.0
  %579 = vmatpush1.msra.mxu0 %v561
  %580 = vmatprep.subr.mxu0 0.0
  %581 = vmatpush1.msra.mxu0 %v562
  %582 = vmatprep.subr.mxu0 0.0
  %583 = vmatpush1.msra.mxu0 %v563
  %584 = vmatprep.subr.mxu0 0.0
  %585 = vmatpush1.msra.mxu0 %v564
  %586 = vmatprep.subr.mxu0 0.0
  %587 = vmatpush1.msra.mxu0 0.0
  %588 = vmatprep.subr.mxu0 0.0
  %589 = vmatpush1.msra.mxu0 0.0
  %590 = vmatprep.subr.mxu0 0.0
  %591 = vmatpush1.msra.mxu0 0.0
  %592 = vmatprep.subr.mxu0 0.0
  %593 = vmatpush1.msra.mxu0 0.0
  %594 = vmatprep.subr.mxu0 0.0
  %595 = vmatpush1.msra.mxu0 0.0
  %596 = vmatprep.subr.mxu0 0.0
  %597 = vmatpush1.msra.mxu0 0.0
  %598 = vmatprep.subr.mxu0 0.0
  %599 = vmatpush1.msra.mxu0 0.0
  %600 = vmatprep.subr.mxu0 0.0
  %601 = vmatpush1.msra.mxu0 0.0
  %602 = vmatprep.subr.mxu0 0.0
  %603 = vmatpush1.msra.mxu0 0.0
  %604 = vmatprep.subr.mxu0 0.0
  %605 = vmatpush1.msra.mxu0 0.0
  %606 = vmatprep.subr.mxu0 0.0
  %607 = vmatpush1.msra.mxu0 0.0
  %608 = vmatprep.subr.mxu0 0.0
  %609 = vmatpush1.msra.mxu0 0.0
  %610 = vmatprep.subr.mxu0 0.0
  %611 = vmatpush1.msra.mxu0 0.0
  %612 = vmatprep.subr.mxu0 0.0
  %613 = vmatpush1.msra.mxu0 0.0
  %614 = vmatprep.subr.mxu0 0.0
  %615 = vmatpush1.msra.mxu0 0.0
  %616 = vmatprep.subr.mxu0 0.0
  %617 = vmatpush1.msra.mxu0 0.0
  %618 = vmatprep.subr.mxu0 0.0
  %619 = vmatpush1.msra.mxu0 0.0
  %620 = vmatprep.subr.mxu0 0.0
  %621 = vmatpush1.msra.mxu0 0.0
  %622 = vmatprep.subr.mxu0 0.0
  %623 = vmatpush1.msra.mxu0 0.0
  %624 = vmatprep.subr.mxu0 0.0
  %625 = vmatpush1.msra.mxu0 0.0
  %626 = vmatprep.subr.mxu0 0.0
  %627 = vmatpush1.msra.mxu0 0.0
  %628 = vmatprep.subr.mxu0 0.0
  %629 = vmatpush1.msra.mxu0 0.0
  %630 = vmatprep.subr.mxu0 0.0
  %631 = vmatpush1.msra.mxu0 0.0
  %632 = vmatprep.subr.mxu0 0.0
  %633 = vmatpush1.msra.mxu0 0.0
  %634 = vmatprep.subr.mxu0 0.0
  %635 = vmatpush1.msra.mxu0 0.0
  %636 = vmatprep.subr.mxu0 0.0
  %637 = vmatpush1.msra.mxu0 0.0
  %638 = vmatprep.subr.mxu0 0.0
  %639 = vmatpush1.msra.mxu0 0.0
  %640 = vmatprep.subr.mxu0 0.0
  %641 = vmatpush1.msra.mxu0 0.0
  %642 = vmatprep.mubr.f32.mxu0 0.0
  %643 = vmatmul.mubr.f32.gmra.mrb[0].mxu0 %v573
  %v644 = vpop.f32.mrb[0].mxu0
  %v645 = vadd.f32 %v570, %v644
  %v646 = vpop.f32.mrb[0].mxu0
  %647 = vmatprep.mubr.f32.mxu0 0.0
  %648 = vmatmul.mubr.f32.gmra.mrb[0].mxu0 %v576
  %v649 = vpop.f32.mrb[0].mxu0
  %v650 = vadd.f32 %v570, %v649
  %v651 = vpop.f32.mrb[0].mxu0
  %652 = vdwg.mxu0
  %653 = vst.msk [vmem:[%s12] sm:$0xff] %vm110, %v645
  %654 = vst.msk [vmem:[%s12 + $0x8] sm:$0xff] %vm110, %v650
  // Predicated region
  $region50: #{mlp_forward.3} parent=0 // pred_check
    _
  $region51: #{mlp_forward.3} parent=0 // pred_check_branch
    %656 = sbr.rel (0) target = $region53
  $region52: #{mlp_forward.3} parent=0 // pred_region
    _
  $region53: #{mlp_forward.3} parent=0 // pred_fallthru
    _
  // Predicated region
  $region54: #{mlp_forward.3} parent=0 // pred_check
    _
  $region55: #{mlp_forward.3} parent=0 // pred_check_branch
    %658 = sbr.rel (0) target = $region57
  $region56: #{mlp_forward.3} parent=0 // pred_region
    _
  $region57: #{mlp_forward.3} parent=0 // pred_fallthru
    _

</llo_original>
